<compile_context>
chip_gen: v5e
topology: v5e:2x2
jax: 0.10.0
libtpu: 0.0.40
codegen_flags: <defaults>
</compile_context>

<pallas_src>
import math

import jax
import jax.numpy as jnp
import numpy as np
from jax.experimental import pallas as pl
from jax.experimental.pallas import tpu as pltpu


def _dsmil_kernel(n_ref,
                  x_ref, wi_ref, bi_ref, wqv_ref, bqv_ref,
                  wp_ref, bp_ref, wfcc_ref, bfcc_ref,
                  out_ref,
                  colmax_s, mfeats_s, qmax_s, m_s, l_s, bacc_s):
    phase = pl.program_id(0)
    t = pl.program_id(1)
    nt = pl.num_programs(1)

    tile_n, d = x_ref.shape
    c = wi_ref.shape[0]
    qdim = wqv_ref.shape[1] - d
    neg = jnp.float32(-1e30)
    scale = jnp.float32(1.0 / math.sqrt(float(qdim)))
    eps2 = jnp.float32(1e-24)   # (1e-12)^2, matches F.normalize eps

    n_total = n_ref[0]
    col_ids = jax.lax.broadcasted_iota(jnp.int32, (c, tile_n), 1)
    valid_cols = (t * tile_n + col_ids) < n_total               # [C, T]

    # x is zero-padded on the host, so no per-row select is needed here; the
    # valid_cols neg-mask (applied before exp) keeps padded rows out of the
    # max / softmax accumulation.
    xm = x_ref[...]                                             # [T, D] bf16

    # ---- phase 0: instance logits -> running column max + top-1 features ----
    @pl.when(phase == 0)
    def _phase0():
        @pl.when(t == 0)
        def _init():
            colmax_s[...] = jnp.full_like(colmax_s, neg)
            mfeats_s[...] = jnp.zeros_like(mfeats_s)

        # f32 logits: keeps the per-class argmax identical to the f32 reference
        # (C is tiny, so the extra MXU cost of f32 here is negligible).
        xf = xm.astype(jnp.float32)
        cls = jax.lax.dot_general(wi_ref[...], xf, (((1,), (1,)), ((), ())),
                                  preferred_element_type=jnp.float32)
        cls = cls + bi_ref[...]
        cls = jnp.where(valid_cols, cls, neg)                   # [C, T]

        tmax = jnp.max(cls, axis=1, keepdims=True)              # [C, 1]
        col_f = col_ids.astype(jnp.float32)
        cand = jnp.where(cls == tmax, col_f, jnp.float32(tile_n))
        targ = jnp.min(cand, axis=1, keepdims=True)             # first max in tile
        onehot = (col_f == targ).astype(xm.dtype)               # [C, T] bf16 0/1
        tile_mfeats = jnp.dot(onehot, xm,
                              preferred_element_type=jnp.float32)  # [C, D]

        # Strict ">" keeps the earliest (lowest-index) maximum across tiles.
        better = tmax > colmax_s[...]                           # [C, 1]
        colmax_s[...] = jnp.where(better, tmax, colmax_s[...])
        mfeats_s[...] = jnp.where(better, tile_mfeats.astype(mfeats_s.dtype),
                                  mfeats_s[...])

    # ---- phase 1: online softmax over instances + bag head -------------------
    @pl.when(phase == 1)
    def _phase1():
        @pl.when(t == 0)
        def _init():
            m_s[...] = jnp.full_like(m_s, neg)
            l_s[...] = jnp.zeros_like(l_s)
            bacc_s[...] = jnp.zeros_like(bacc_s)
            # q_max hoisted out of the per-tile body: mfeats_s is frozen after
            # phase 0, so compute it exactly once into a tiny scratch.
            qm = jnp.dot(mfeats_s[...], wqv_ref[:, :qdim],
                         preferred_element_type=jnp.float32) + bqv_ref[:, :qdim]
            qmax_s[...] = qm.astype(qmax_s.dtype)

        # Fused Q|V projection: one bf16 MXU pass over the instance tile.
        qv = jnp.dot(xm, wqv_ref[...],
                     preferred_element_type=jnp.float32) + bqv_ref[...]   # [T, Q+D]
        q = qv[:, :qdim]
        v = jnp.maximum(qv[:, qdim:], 0.0)
        qn = q * jax.lax.rsqrt(jnp.maximum(jnp.sum(q * q, axis=1, keepdims=True), eps2))
        vn = v * jax.lax.rsqrt(jnp.maximum(jnp.sum(v * v, axis=1, keepdims=True), eps2))

        # scores^T : [C, T], bf16 operands, f32 result; mask (f32) before exp.
        s = jax.lax.dot_general(qmax_s[...], qn.astype(jnp.bfloat16),
                                (((1,), (1,)), ((), ())),
                                preferred_element_type=jnp.float32) * scale
        s = jnp.where(valid_cols, s, neg)

        m_new = jnp.maximum(m_s[...], jnp.max(s, axis=1, keepdims=True))  # [C, 1]
        alpha = jnp.exp(m_s[...] - m_new)
        p = jnp.exp(s - m_new)                                            # [C, T]
        l_s[...] = alpha * l_s[...] + jnp.sum(p, axis=1, keepdims=True)
        bacc_s[...] = alpha * bacc_s[...] + jnp.dot(
            p.astype(jnp.bfloat16), vn.astype(jnp.bfloat16),
            preferred_element_type=jnp.float32)                          # [C, D]
        m_s[...] = m_new

        @pl.when(t == nt - 1)
        def _finalize():
            inv_l = pl.reciprocal(l_s[...], approx=True)                  # [C, 1]
            b_mat = bacc_s[...] * inv_l                                   # [C, D]
            bp = jnp.dot(b_mat, wp_ref[...],
                         preferred_element_type=jnp.float32) + bp_ref[...]

            # fcc Conv1d(C, C, kernel=D): full contraction over (class, feat);
            # runs once per bag -> short unrolled loop of [1, D] @ [D, C] dots.
            bag = bfcc_ref[...]                                           # [1, C]
            for i in range(c):
                bag = bag + jnp.dot(bp[i:i + 1, :], wfcc_ref[i],
                                    preferred_element_type=jnp.float32)

            # [C, 1] -> [1, C] without a relayout: scaled identity, sublane-reduce.
            ri = jax.lax.broadcasted_iota(jnp.int32, (c, c), 0)
            ci = jax.lax.broadcasted_iota(jnp.int32, (c, c), 1)
            eye = (ri == ci).astype(jnp.float32)
            maxpred = jnp.sum(colmax_s[...] * eye, axis=0, keepdims=True)

            hi = jax.nn.sigmoid(maxpred)
            hb = jax.nn.sigmoid(bag)

            # cumprod(1 - h) along classes via upper-triangular matmul in log
            # space; clamp avoids log(0) -> -inf * 0 -> NaN at sigmoid saturation.
            tri = (ri <= ci).astype(jnp.float32)
            tiny = jnp.float32(1e-30)
            si = jnp.exp(jnp.dot(jnp.log(jnp.maximum(1.0 - hi, tiny)), tri,
                                 preferred_element_type=jnp.float32))
            sb = jnp.exp(jnp.dot(jnp.log(jnp.maximum(1.0 - hb, tiny)), tri,
                                 preferred_element_type=jnp.float32))

            out_ref[0:1, :] = maxpred
            out_ref[1:2, :] = bag
            out_ref[2:3, :] = hi
            out_ref[3:4, :] = si
            out_ref[4:5, :] = hb
            out_ref[5:6, :] = sb


def dsmil_forward(x, params, *, tile_n=None, n_bucket=None):
    """DSMIL forward. `params` holds torch-layout weights:
      i_w [C, D],  i_b [C]              (i_classifier.fc)
      q_w [128, D], q_b [128]           (b_classifier.q)
      v_w [D, D],  v_b [D]              (b_classifier.v[1], Dropout(0) = identity)
      proj_w [D, D], proj_b [D]         (b_classifier.proj)
      fcc_w [C, C, D], fcc_b [C]        (b_classifier.fcc Conv1d(out, in, k=D))
    Returns (max_prediction, prediction_bag, hazards_i, S_i, hazards_b, S_b),
    each [1, C]."""
    f32, bf16 = jnp.float32, jnp.bfloat16
    n, d = x.shape
    c = params["i_w"].shape[0]
    qdim = params["q_w"].shape[0]

    # ---- host-side weight packing -------------------------------------------
    # bf16 for the streamed / large MXU operands, f32 for biases, the instance
    # classifier (argmax fidelity) and the run-once bag head.
    w_i = params["i_w"].astype(f32)                                   # [C, D]
    b_i = params["i_b"].astype(f32).reshape(c, 1)                     # [C, 1]
    w_qv = jnp.concatenate([params["q_w"].T, params["v_w"].T],
                           axis=1).astype(bf16)                       # [D, Q+D]
    b_qv = jnp.concatenate([params["q_b"], params["v_b"]]).astype(f32).reshape(1, qdim + d)
    w_p = params["proj_w"].T.astype(f32)                              # [D, D]
    b_p = params["proj_b"].astype(f32).reshape(1, d)
    w_fcc = jnp.transpose(params["fcc_w"], (1, 2, 0)).astype(f32)     # [C_in, D, C_out]
    b_fcc = params["fcc_b"].astype(f32).reshape(1, c)

    x = x.astype(bf16)                                                # halve HBM traffic

    weights = (w_i, b_i, w_qv, b_qv, w_p, b_p, w_fcc, b_fcc)
    weight_bytes = sum(int(np.prod(a.shape)) * a.dtype.itemsize for a in weights)
    scratch_bytes = 3 * c * 4 + c * d * 4 + c * d * 2 + c * qdim * 2

    # ---- generation-aware VMEM budget / tiling -------------------------------
    try:
        vmem_cap = int(getattr(pltpu.get_tpu_info(), "vmem_capacity_bytes", 64 << 20))
    except Exception:  # non-TPU tracing / emulation fallback
        vmem_cap = 64 << 20
    budget = min(int(0.55 * vmem_cap), 80 << 20)         # ~35 MiB on v7x, 70-80 MiB on v5e/v6e
    vmem_limit = min(int(0.75 * vmem_cap), 100 << 20)    # ~48 MiB on v7x, ~96 MiB on v5e/v6e

    x_row_bytes = d * 2                                  # bf16
    n_eff = n if n_bucket is None else max(int(n_bucket), n)
    if tile_n is None:
        # Whole-bag (single tile) whenever x (worst-case double-buffered) plus the
        # single-buffered weight slabs fit the budget -> x is DMA'd only once.
        if 2 * n_eff * x_row_bytes + weight_bytes + scratch_bytes <= budget:
            tile_n = n_eff
        else:
            cand = 2048 if vmem_cap >= (96 << 20) else 1024
            while cand > 256 and 2 * cand * x_row_bytes + weight_bytes + scratch_bytes > budget:
                cand //= 2
            tile_n = cand
    tile_n = max(1, min(int(tile_n), n_eff))
    if tile_n != n_eff:
        tile_n = max(8, (tile_n // 8) * 8)
    n_pad = tile_n * ((n_eff + tile_n - 1) // tile_n)
    nt = n_pad // tile_n
    if n_pad != n:
        x = jnp.pad(x, ((0, n_pad - n), (0, 0)))

    # ---- specs ----------------------------------------------------------------
    def fixed(arr):
        nd = arr.ndim
        # Constant index map -> never re-fetched; single buffer saves VMEM.
        return pl.BlockSpec(arr.shape, lambda p, t, n_sm, _nd=nd: (0,) * _nd,
                            pipeline_mode=pl.Buffered(1))

    grid_spec = pltpu.PrefetchScalarGridSpec(
        num_scalar_prefetch=1,
        grid=(2, nt),
        in_specs=[
            pl.BlockSpec((tile_n, d), lambda p, t, n_sm: (t, 0)),      # x tiles
            fixed(w_i), fixed(b_i), fixed(w_qv), fixed(b_qv),
            fixed(w_p), fixed(b_p), fixed(w_fcc), fixed(b_fcc),
        ],
        out_specs=pl.BlockSpec((6, c), lambda p, t, n_sm: (0, 0)),
        scratch_shapes=[
            pltpu.VMEM((c, 1), f32),     # running column max of instance logits
            pltpu.VMEM((c, d), bf16),    # features of the top-1 instance per class
            pltpu.VMEM((c, qdim), bf16), # hoisted q_max (computed once in phase 1)
            pltpu.VMEM((c, 1), f32),     # online softmax running max
            pltpu.VMEM((c, 1), f32),     # online softmax running denominator
            pltpu.VMEM((c, d), f32),     # running (unnormalized) B = A^T @ Vn
        ],
    )

    flops = (2 * n_pad * d * (qdim + d)      # fused Q|V projection
             + 2 * n_pad * c * d * 2         # instance logits + A^T @ Vn
             + 2 * n_pad * c * qdim)         # scores
    cost = pl.CostEstimate(flops=int(flops),
                           transcendentals=int(n_pad * (c + 2)),
                           bytes_accessed=int(2 * n_pad * d * 2 + weight_bytes + 6 * c * 4))

    out = pl.pallas_call(
        _dsmil_kernel,
        grid_spec=grid_spec,
        out_shape=jax.ShapeDtypeStruct((6, c), f32),
        compiler_params=pltpu.CompilerParams(
            dimension_semantics=("arbitrary", "arbitrary"),
            vmem_limit_bytes=int(vmem_limit),
        ),
        cost_estimate=cost,
    )(jnp.array([n], jnp.int32), x, *weights)

    return (out[0:1], out[1:2], out[2:3], out[3:4], out[4:5], out[5:6])


def dsmil_reference(x, params):
    """Pure-JAX reference matching the PyTorch DSMIL forward."""
    with jax.default_matmul_precision("highest"):
        x = x.astype(jnp.float32)
        classes = x @ params["i_w"].T + params["i_b"]
        q = x @ params["q_w"].T + params["q_b"]
        v = jnp.maximum(x @ params["v_w"].T + params["v_b"], 0.0)
        qn = q / jnp.maximum(jnp.linalg.norm(q, axis=-1, keepdims=True), 1e-12)
        vn = v / jnp.maximum(jnp.linalg.norm(v, axis=-1, keepdims=True), 1e-12)
        m_idx = jnp.argmax(classes, axis=0)
        m_feats = x[m_idx]
        q_max = m_feats @ params["q_w"].T + params["q_b"]
        a = jax.nn.softmax((qn @ q_max.T) / jnp.sqrt(jnp.float32(q.shape[1])), axis=0)
        b = a.T @ vn
        bp = b @ params["proj_w"].T + params["proj_b"]
        bag = (params["fcc_b"] + jnp.einsum("id,oid->o", bp, params["fcc_w"]))[None, :]
        maxpred = jnp.max(classes, axis=0, keepdims=True)
        hi = jax.nn.sigmoid(maxpred)
        hb = jax.nn.sigmoid(bag)
        si = jnp.cumprod(1.0 - hi, axis=1)
        sb = jnp.cumprod(1.0 - hb, axis=1)
        return maxpred, bag, hi, si, hb, sb


if __name__ == "__main__":
    key = jax.random.PRNGKey(0)
    N, D, C, QDIM = 24, 32, 4, 128            # instances, input_dim, n_classes, q dim
    ks = jax.random.split(key, 8)

    def linear_init(k, out_f, in_f, scale=0.05):
        kw, kb = jax.random.split(k)
        w = jax.random.normal(kw, (out_f, in_f), jnp.float32) * scale
        b = jax.random.normal(kb, (out_f,), jnp.float32) * scale
        return w, b

    i_w, i_b = linear_init(ks[1], C, D)           # i_classifier.fc
    q_w, q_b = linear_init(ks[2], QDIM, D)        # b_classifier.q
    v_w, v_b = linear_init(ks[3], D, D)           # b_classifier.v
    proj_w, proj_b = linear_init(ks[4], D, D)     # b_classifier.proj
    fcc_w = jax.random.normal(ks[5], (C, C, D), jnp.float32) * 0.05   # Conv1d [out,in,k]
    fcc_b = jax.random.normal(ks[6], (C,), jnp.float32) * 0.05

    x = jax.random.normal(ks[0], (N, D), jnp.float32)
    # Plant a clearly dominant instance per class so the per-class top-1 choice
    # has a comfortable margin (robust to bf16 input rounding).
    for ci in range(C):
        wdir = i_w[ci] / jnp.linalg.norm(i_w[ci])
        x = x.at[ci * 3].add(3.0 * wdir)
    # The kernel streams x in bf16; evaluate kernel and reference on the same
    # bf16-representable input so only weight/matmul precision differs.
    x = x.astype(jnp.bfloat16).astype(jnp.float32)

    params = dict(i_w=i_w, i_b=i_b, q_w=q_w, q_b=q_b, v_w=v_w, v_b=v_b,
                  proj_w=proj_w, proj_b=proj_b, fcc_w=fcc_w, fcc_b=fcc_b)

    refs = jax.block_until_ready(dsmil_reference(x, params))

    # Exercise both paths: whole-bag (nt == 1) and streaming (tile_n=8 -> 3 tiles).
    for kwargs in (dict(), dict(tile_n=8)):
        outs = jax.block_until_ready(dsmil_forward(x, params, **kwargs))
        for got, want in zip(outs, refs):
            np.testing.assert_allclose(np.asarray(got), np.asarray(want),
                                       rtol=2e-2, atol=2e-2)
    print("KERNEL_OK")
</pallas_src>

<mosaic_0001>
module attributes {stable_mosaic.version = 11 : i64} {
  func.func @_dsmil_kernel(%arg0: i32, %arg1: i32, %arg2: memref<1xi32, #tpu.memory_space<smem>>, %arg3: memref<24x32xbf16, #tpu.memory_space<vmem>>, %arg4: memref<4x32xf32, #tpu.memory_space<vmem>>, %arg5: memref<4x1xf32, #tpu.memory_space<vmem>>, %arg6: memref<32x160xbf16, #tpu.memory_space<vmem>>, %arg7: memref<1x160xf32, #tpu.memory_space<vmem>>, %arg8: memref<32x32xf32, #tpu.memory_space<vmem>>, %arg9: memref<1x32xf32, #tpu.memory_space<vmem>>, %arg10: memref<4x32x4xf32, #tpu.memory_space<vmem>>, %arg11: memref<1x4xf32, #tpu.memory_space<vmem>>, %arg12: memref<6x4xf32, #tpu.memory_space<vmem>>, %arg13: memref<4x1xf32, #tpu.memory_space<vmem>>, %arg14: memref<4x32xbf16, #tpu.memory_space<vmem>>, %arg15: memref<4x128xbf16, #tpu.memory_space<vmem>>, %arg16: memref<4x1xf32, #tpu.memory_space<vmem>>, %arg17: memref<4x1xf32, #tpu.memory_space<vmem>>, %arg18: memref<4x32xf32, #tpu.memory_space<vmem>>) attributes {dimension_semantics = [#tpu.dimension_semantics<arbitrary>, #tpu.dimension_semantics<arbitrary>], iteration_bounds = array<i64: 2, 1>, scalar_prefetch = 1 : i64, scratch_operands = 6 : i64, tpu.core_type = #tpu.core_type<tc>, window_params = [{transform_indices = @transform_0, window_bounds = array<i64: 24, 32>}, {pipeline_mode = #tpu.pipeline_mode<synchronous>, transform_indices = @transform_1, window_bounds = array<i64: 4, 32>}, {pipeline_mode = #tpu.pipeline_mode<synchronous>, transform_indices = @transform_2, window_bounds = array<i64: 4, 1>}, {pipeline_mode = #tpu.pipeline_mode<synchronous>, transform_indices = @transform_3, window_bounds = array<i64: 32, 160>}, {pipeline_mode = #tpu.pipeline_mode<synchronous>, transform_indices = @transform_4, window_bounds = array<i64: 1, 160>}, {pipeline_mode = #tpu.pipeline_mode<synchronous>, transform_indices = @transform_5, window_bounds = array<i64: 32, 32>}, {pipeline_mode = #tpu.pipeline_mode<synchronous>, transform_indices = @transform_6, window_bounds = array<i64: 1, 32>}, {pipeline_mode = #tpu.pipeline_mode<synchronous>, transform_indices = @transform_7, window_bounds = array<i64: 4, 32, 4>}, {pipeline_mode = #tpu.pipeline_mode<synchronous>, transform_indices = @transform_8, window_bounds = array<i64: 1, 4>}, {pipeline_mode = #tpu.pipeline_mode<synchronous>, transform_indices = @transform_9, window_bounds = array<i64: 6, 4>}]} {
    %c0 = arith.constant 0 : index
    %0 = memref.load %arg2[%c0] : memref<1xi32, #tpu.memory_space<smem>>
    %1 = tpu.iota {dimensions = array<i32: 1>} : vector<4x24xi32>
    %c24_i32 = arith.constant 24 : i32
    %2 = arith.muli %arg1, %c24_i32 : i32
    %3 = vector.broadcast %2 : i32 to vector<4x24xi32>
    %4 = arith.addi %3, %1 : vector<4x24xi32>
    %5 = vector.broadcast %0 : i32 to vector<4x24xi32>
    %6 = arith.cmpi slt, %4, %5 : vector<4x24xi32>
    %c0_0 = arith.constant 0 : index
    %c0_1 = arith.constant 0 : index
    %7 = vector.load %arg3[%c0_0, %c0_1] : memref<24x32xbf16, #tpu.memory_space<vmem>>, vector<24x32xbf16>
    %c0_i32 = arith.constant 0 : i32
    %8 = arith.cmpi eq, %arg0, %c0_i32 : i32
    %9 = arith.extui %8 : i1 to i32
    %cst = arith.constant -1.000000e+30 : f32
    %c0_i32_2 = arith.constant 0 : i32
    %10 = arith.cmpi ne, %9, %c0_i32_2 : i32
    scf.if %10 {
      %c0_i32_7 = arith.constant 0 : i32
      %14 = arith.cmpi eq, %arg1, %c0_i32_7 : i32
      %15 = arith.extui %14 : i1 to i32
      %c0_i32_8 = arith.constant 0 : i32
      %16 = arith.cmpi ne, %15, %c0_i32_8 : i32
      scf.if %16 {
        %51 = vector.broadcast %cst : f32 to vector<4x1xf32>
        %c0_28 = arith.constant 0 : index
        %c0_29 = arith.constant 0 : index
        %52 = vector.load %arg13[%c0_28, %c0_29] : memref<4x1xf32, #tpu.memory_space<vmem>>, vector<4x1xf32>
        tpu.vector_store %arg13[%c0_28, %c0_29], %51 {strides = array<i32>} : memref<4x1xf32, #tpu.memory_space<vmem>>, vector<4x1xf32>,
        %cst_30 = arith.constant 0.000000e+00 : bf16
        %53 = vector.broadcast %cst_30 : bf16 to vector<4x32xbf16>
        %c0_31 = arith.constant 0 : index
        %c0_32 = arith.constant 0 : index
        %54 = vector.load %arg14[%c0_31, %c0_32] : memref<4x32xbf16, #tpu.memory_space<vmem>>, vector<4x32xbf16>
        tpu.vector_store %arg14[%c0_31, %c0_32], %53 {strides = array<i32>} : memref<4x32xbf16, #tpu.memory_space<vmem>>, vector<4x32xbf16>,
      } else {
      }
      %17 = arith.extf %7 : vector<24x32xbf16> to vector<24x32xf32>
      %c0_9 = arith.constant 0 : index
      %c0_10 = arith.constant 0 : index
      %18 = vector.load %arg4[%c0_9, %c0_10] : memref<4x32xf32, #tpu.memory_space<vmem>>, vector<4x32xf32>
      %cst_11 = arith.constant dense<0.000000e+00> : vector<4x24xf32>
      %19 = tpu.matmul %18, %17, %cst_11 {dimension_numbers = #tpu.dot_dimension_numbers<[1], [1], [0], [0], [0, 0, 1, 0], [], []>} : vector<4x32xf32>, vector<24x32xf32>, vector<4x24xf32> -> vector<4x24xf32>
      %c0_12 = arith.constant 0 : index
      %c0_13 = arith.constant 0 : index
      %20 = vector.load %arg5[%c0_12, %c0_13] : memref<4x1xf32, #tpu.memory_space<vmem>>, vector<4x1xf32>
      %21 = vector.broadcast %20 : vector<4x1xf32> to vector<4x24xf32>
      %22 = arith.addf %19, %21 : vector<4x24xf32>
      %23 = vector.broadcast %cst : f32 to vector<4x24xf32>
      %24 = arith.select %6, %22, %23 : vector<4x24xi1>, vector<4x24xf32>
      %cst_14 = arith.constant dense<0xFF800000> : vector<4xf32>
      %25 = vector.multi_reduction <maximumf>, %24, %cst_14 [1] : vector<4x24xf32> to vector<4xf32>
      %26 = vector.shape_cast %25 : vector<4xf32> to vector<4x1xf32>
      %27 = arith.sitofp %1 : vector<4x24xi32> to vector<4x24xf32>
      %28 = vector.broadcast %26 : vector<4x1xf32> to vector<4x24xf32>
      %29 = arith.cmpf oeq, %24, %28 : vector<4x24xf32>
      %cst_15 = arith.constant 2.400000e+01 : f32
      %30 = vector.broadcast %cst_15 : f32 to vector<4x24xf32>
      %31 = arith.select %29, %27, %30 : vector<4x24xi1>, vector<4x24xf32>
      %cst_16 = arith.constant dense<0x7F800000> : vector<4xf32>
      %32 = vector.multi_reduction <minimumf>, %31, %cst_16 [1] : vector<4x24xf32> to vector<4xf32>
      %33 = vector.shape_cast %32 : vector<4xf32> to vector<4x1xf32>
      %34 = vector.broadcast %33 : vector<4x1xf32> to vector<4x24xf32>
      %35 = arith.cmpf oeq, %27, %34 : vector<4x24xf32>
      %36 = arith.extui %35 : vector<4x24xi1> to vector<4x24xi32>
      %37 = arith.sitofp %36 : vector<4x24xi32> to vector<4x24xf32>
      %38 = arith.truncf %37 : vector<4x24xf32> to vector<4x24xbf16>
      %cst_17 = arith.constant dense<0.000000e+00> : vector<4x32xf32>
      %39 = tpu.matmul %38, %7, %cst_17 {dimension_numbers = #tpu.dot_dimension_numbers<[1], [0], [0], [1], [0, 0, 1, 1], [], []>} : vector<4x24xbf16>, vector<24x32xbf16>, vector<4x32xf32> -> vector<4x32xf32>
      %c0_18 = arith.constant 0 : index
      %c0_19 = arith.constant 0 : index
      %40 = vector.load %arg13[%c0_18, %c0_19] : memref<4x1xf32, #tpu.memory_space<vmem>>, vector<4x1xf32>
      %41 = arith.cmpf ogt, %26, %40 : vector<4x1xf32>
      %c0_20 = arith.constant 0 : index
      %c0_21 = arith.constant 0 : index
      %42 = vector.load %arg13[%c0_20, %c0_21] : memref<4x1xf32, #tpu.memory_space<vmem>>, vector<4x1xf32>
      %43 = arith.select %41, %26, %42 : vector<4x1xi1>, vector<4x1xf32>
      %c0_22 = arith.constant 0 : index
      %c0_23 = arith.constant 0 : index
      %44 = vector.load %arg13[%c0_22, %c0_23] : memref<4x1xf32, #tpu.memory_space<vmem>>, vector<4x1xf32>
      tpu.vector_store %arg13[%c0_22, %c0_23], %43 {strides = array<i32>} : memref<4x1xf32, #tpu.memory_space<vmem>>, vector<4x1xf32>,
      %45 = arith.truncf %39 : vector<4x32xf32> to vector<4x32xbf16>
      %c0_24 = arith.constant 0 : index
      %c0_25 = arith.constant 0 : index
      %46 = vector.load %arg14[%c0_24, %c0_25] : memref<4x32xbf16, #tpu.memory_space<vmem>>, vector<4x32xbf16>
      %47 = vector.shape_cast %41 : vector<4x1xi1> to vector<4x1xi1>
      %48 = vector.broadcast %47 : vector<4x1xi1> to vector<4x32xi1>
      %49 = arith.select %48, %45, %46 : vector<4x32xi1>, vector<4x32xbf16>
      %c0_26 = arith.constant 0 : index
      %c0_27 = arith.constant 0 : index
      %50 = vector.load %arg14[%c0_26, %c0_27] : memref<4x32xbf16, #tpu.memory_space<vmem>>, vector<4x32xbf16>
      tpu.vector_store %arg14[%c0_26, %c0_27], %49 {strides = array<i32>} : memref<4x32xbf16, #tpu.memory_space<vmem>>, vector<4x32xbf16>,
    } else {
    }
    %c1_i32 = arith.constant 1 : i32
    %11 = arith.cmpi eq, %arg0, %c1_i32 : i32
    %12 = arith.extui %11 : i1 to i32
    %cst_3 = arith.constant -1.000000e+30 : f32
    %cst_4 = arith.constant 1.000000e-24 : f32
    %cst_5 = arith.constant 0.0883883461 : f32
    %c0_i32_6 = arith.constant 0 : i32
    %13 = arith.cmpi ne, %12, %c0_i32_6 : i32
    scf.if %13 {
      %c0_i32_7 = arith.constant 0 : i32
      %14 = arith.cmpi eq, %arg1, %c0_i32_7 : i32
      %15 = arith.extui %14 : i1 to i32
      %c0_i32_8 = arith.constant 0 : i32
      %16 = arith.cmpi ne, %15, %c0_i32_8 : i32
      scf.if %16 {
        %77 = vector.broadcast %cst_3 : f32 to vector<4x1xf32>
        %c0_39 = arith.constant 0 : index
        %c0_40 = arith.constant 0 : index
        %78 = vector.load %arg16[%c0_39, %c0_40] : memref<4x1xf32, #tpu.memory_space<vmem>>, vector<4x1xf32>
        tpu.vector_store %arg16[%c0_39, %c0_40], %77 {strides = array<i32>} : memref<4x1xf32, #tpu.memory_space<vmem>>, vector<4x1xf32>,
        %cst_41 = arith.constant 0.000000e+00 : f32
        %79 = vector.broadcast %cst_41 : f32 to vector<4x1xf32>
        %c0_42 = arith.constant 0 : index
        %c0_43 = arith.constant 0 : index
        %80 = vector.load %arg17[%c0_42, %c0_43] : memref<4x1xf32, #tpu.memory_space<vmem>>, vector<4x1xf32>
        tpu.vector_store %arg17[%c0_42, %c0_43], %79 {strides = array<i32>} : memref<4x1xf32, #tpu.memory_space<vmem>>, vector<4x1xf32>,
        %cst_44 = arith.constant 0.000000e+00 : f32
        %81 = vector.broadcast %cst_44 : f32 to vector<4x32xf32>
        %c0_45 = arith.constant 0 : index
        %c0_46 = arith.constant 0 : index
        %82 = vector.load %arg18[%c0_45, %c0_46] : memref<4x32xf32, #tpu.memory_space<vmem>>, vector<4x32xf32>
        tpu.vector_store %arg18[%c0_45, %c0_46], %81 {strides = array<i32>} : memref<4x32xf32, #tpu.memory_space<vmem>>, vector<4x32xf32>,
        %c0_47 = arith.constant 0 : index
        %c0_48 = arith.constant 0 : index
        %83 = vector.load %arg14[%c0_47, %c0_48] : memref<4x32xbf16, #tpu.memory_space<vmem>>, vector<4x32xbf16>
        %c0_49 = arith.constant 0 : index
        %c0_50 = arith.constant 0 : index
        %84 = vector.load %arg6[%c0_49, %c0_50] : memref<32x160xbf16, #tpu.memory_space<vmem>>, vector<32x128xbf16>
        %cst_51 = arith.constant dense<0.000000e+00> : vector<4x128xf32>
        %85 = tpu.matmul %83, %84, %cst_51 {dimension_numbers = #tpu.dot_dimension_numbers<[1], [0], [0], [1], [0, 0, 1, 1], [], []>} : vector<4x32xbf16>, vector<32x128xbf16>, vector<4x128xf32> -> vector<4x128xf32>
        %c0_52 = arith.constant 0 : index
        %c0_53 = arith.constant 0 : index
        %86 = vector.load %arg7[%c0_52, %c0_53] : memref<1x160xf32, #tpu.memory_space<vmem>>, vector<1x128xf32>
        %87 = vector.broadcast %86 : vector<1x128xf32> to vector<4x128xf32>
        %88 = arith.addf %85, %87 : vector<4x128xf32>
        %89 = arith.truncf %88 : vector<4x128xf32> to vector<4x128xbf16>
        %c0_54 = arith.constant 0 : index
        %c0_55 = arith.constant 0 : index
        %90 = vector.load %arg15[%c0_54, %c0_55] : memref<4x128xbf16, #tpu.memory_space<vmem>>, vector<4x128xbf16>
        tpu.vector_store %arg15[%c0_54, %c0_55], %89 {strides = array<i32>} : memref<4x128xbf16, #tpu.memory_space<vmem>>, vector<4x128xbf16>,
      } else {
      }
      %c0_9 = arith.constant 0 : index
      %c0_10 = arith.constant 0 : index
      %17 = vector.load %arg6[%c0_9, %c0_10] : memref<32x160xbf16, #tpu.memory_space<vmem>>, vector<32x160xbf16>
      %cst_11 = arith.constant dense<0.000000e+00> : vector<24x160xf32>
      %18 = tpu.matmul %7, %17, %cst_11 {dimension_numbers = #tpu.dot_dimension_numbers<[1], [0], [0], [1], [0, 0, 1, 1], [], []>} : vector<24x32xbf16>, vector<32x160xbf16>, vector<24x160xf32> -> vector<24x160xf32>
      %c0_12 = arith.constant 0 : index
      %c0_13 = arith.constant 0 : index
      %19 = vector.load %arg7[%c0_12, %c0_13] : memref<1x160xf32, #tpu.memory_space<vmem>>, vector<1x160xf32>
      %20 = vector.broadcast %19 : vector<1x160xf32> to vector<24x160xf32>
      %21 = arith.addf %18, %20 : vector<24x160xf32>
      %22 = vector.extract_strided_slice %21 {offsets = [0, 0], sizes = [24, 128], strides = [1, 1]} : vector<24x160xf32> to vector<24x128xf32>
      %23 = vector.extract_strided_slice %21 {offsets = [0, 128], sizes = [24, 32], strides = [1, 1]} : vector<24x160xf32> to vector<24x32xf32>
      %cst_14 = arith.constant 0.000000e+00 : f32
      %24 = vector.broadcast %cst_14 : f32 to vector<24x32xf32>
      %25 = arith.maximumf %23, %24 : vector<24x32xf32>
      %26 = arith.mulf %22, %22 : vector<24x128xf32>
      %cst_15 = arith.constant dense<0.000000e+00> : vector<24xf32>
      %27 = vector.multi_reduction <add>, %26, %cst_15 [1] : vector<24x128xf32> to vector<24xf32>
      %28 = vector.shape_cast %27 : vector<24xf32> to vector<24x1xf32>
      %29 = vector.broadcast %cst_4 : f32 to vector<24x1xf32>
      %30 = arith.maximumf %28, %29 : vector<24x1xf32>
      %31 = math.rsqrt %30 : vector<24x1xf32>
      %32 = vector.broadcast %31 : vector<24x1xf32> to vector<24x128xf32>
      %33 = arith.mulf %22, %32 : vector<24x128xf32>
      %34 = arith.mulf %25, %25 : vector<24x32xf32>
      %cst_16 = arith.constant dense<0.000000e+00> : vector<24xf32>
      %35 = vector.multi_reduction <add>, %34, %cst_16 [1] : vector<24x32xf32> to vector<24xf32>
      %36 = vector.shape_cast %35 : vector<24xf32> to vector<24x1xf32>
      %37 = vector.broadcast %cst_4 : f32 to vector<24x1xf32>
      %38 = arith.maximumf %36, %37 : vector<24x1xf32>
      %39 = math.rsqrt %38 : vector<24x1xf32>
      %40 = vector.broadcast %39 : vector<24x1xf32> to vector<24x32xf32>
      %41 = arith.mulf %25, %40 : vector<24x32xf32>
      %c0_17 = arith.constant 0 : index
      %c0_18 = arith.constant 0 : index
      %42 = vector.load %arg15[%c0_17, %c0_18] : memref<4x128xbf16, #tpu.memory_space<vmem>>, vector<4x128xbf16>
      %43 = arith.truncf %33 : vector<24x128xf32> to vector<24x128xbf16>
      %cst_19 = arith.constant dense<0.000000e+00> : vector<4x24xf32>
      %44 = tpu.matmul %42, %43, %cst_19 {dimension_numbers = #tpu.dot_dimension_numbers<[1], [1], [0], [0], [0, 0, 1, 0], [], []>} : vector<4x128xbf16>, vector<24x128xbf16>, vector<4x24xf32> -> vector<4x24xf32>
      %45 = vector.broadcast %cst_5 : f32 to vector<4x24xf32>
      %46 = arith.mulf %44, %45 : vector<4x24xf32>
      %47 = vector.broadcast %cst_3 : f32 to vector<4x24xf32>
      %48 = arith.select %6, %46, %47 : vector<4x24xi1>, vector<4x24xf32>
      %c0_20 = arith.constant 0 : index
      %c0_21 = arith.constant 0 : index
      %49 = vector.load %arg16[%c0_20, %c0_21] : memref<4x1xf32, #tpu.memory_space<vmem>>, vector<4x1xf32>
      %cst_22 = arith.constant dense<0xFF800000> : vector<4xf32>
      %50 = vector.multi_reduction <maximumf>, %48, %cst_22 [1] : vector<4x24xf32> to vector<4xf32>
      %51 = vector.shape_cast %50 : vector<4xf32> to vector<4x1xf32>
      %52 = arith.maximumf %49, %51 : vector<4x1xf32>
      %c0_23 = arith.constant 0 : index
      %c0_24 = arith.constant 0 : index
      %53 = vector.load %arg16[%c0_23, %c0_24] : memref<4x1xf32, #tpu.memory_space<vmem>>, vector<4x1xf32>
      %54 = arith.subf %53, %52 : vector<4x1xf32>
      %55 = math.exp %54 : vector<4x1xf32>
      %56 = vector.broadcast %52 : vector<4x1xf32> to vector<4x24xf32>
      %57 = arith.subf %48, %56 : vector<4x24xf32>
      %58 = math.exp %57 : vector<4x24xf32>
      %c0_25 = arith.constant 0 : index
      %c0_26 = arith.constant 0 : index
      %59 = vector.load %arg17[%c0_25, %c0_26] : memref<4x1xf32, #tpu.memory_space<vmem>>, vector<4x1xf32>
      %60 = arith.mulf %55, %59 : vector<4x1xf32>
      %cst_27 = arith.constant dense<0.000000e+00> : vector<4xf32>
      %61 = vector.multi_reduction <add>, %58, %cst_27 [1] : vector<4x24xf32> to vector<4xf32>
      %62 = vector.shape_cast %61 : vector<4xf32> to vector<4x1xf32>
      %63 = arith.addf %60, %62 : vector<4x1xf32>
      %c0_28 = arith.constant 0 : index
      %c0_29 = arith.constant 0 : index
      %64 = vector.load %arg17[%c0_28, %c0_29] : memref<4x1xf32, #tpu.memory_space<vmem>>, vector<4x1xf32>
      tpu.vector_store %arg17[%c0_28, %c0_29], %63 {strides = array<i32>} : memref<4x1xf32, #tpu.memory_space<vmem>>, vector<4x1xf32>,
      %c0_30 = arith.constant 0 : index
      %c0_31 = arith.constant 0 : index
      %65 = vector.load %arg18[%c0_30, %c0_31] : memref<4x32xf32, #tpu.memory_space<vmem>>, vector<4x32xf32>
      %66 = vector.broadcast %55 : vector<4x1xf32> to vector<4x32xf32>
      %67 = arith.mulf %66, %65 : vector<4x32xf32>
      %68 = arith.truncf %58 : vector<4x24xf32> to vector<4x24xbf16>
      %69 = arith.truncf %41 : vector<24x32xf32> to vector<24x32xbf16>
      %cst_32 = arith.constant dense<0.000000e+00> : vector<4x32xf32>
      %70 = tpu.matmul %68, %69, %cst_32 {dimension_numbers = #tpu.dot_dimension_numbers<[1], [0], [0], [1], [0, 0, 1, 1], [], []>} : vector<4x24xbf16>, vector<24x32xbf16>, vector<4x32xf32> -> vector<4x32xf32>
      %71 = arith.addf %67, %70 : vector<4x32xf32>
      %c0_33 = arith.constant 0 : index
      %c0_34 = arith.constant 0 : index
      %72 = vector.load %arg18[%c0_33, %c0_34] : memref<4x32xf32, #tpu.memory_space<vmem>>, vector<4x32xf32>
      tpu.vector_store %arg18[%c0_33, %c0_34], %71 {strides = array<i32>} : memref<4x32xf32, #tpu.memory_space<vmem>>, vector<4x32xf32>,
      %c0_35 = arith.constant 0 : index
      %c0_36 = arith.constant 0 : index
      %73 = vector.load %arg16[%c0_35, %c0_36] : memref<4x1xf32, #tpu.memory_space<vmem>>, vector<4x1xf32>
      tpu.vector_store %arg16[%c0_35, %c0_36], %52 {strides = array<i32>} : memref<4x1xf32, #tpu.memory_space<vmem>>, vector<4x1xf32>,
      %c0_i32_37 = arith.constant 0 : i32
      %74 = arith.cmpi eq, %arg1, %c0_i32_37 : i32
      %75 = arith.extui %74 : i1 to i32
      %c0_i32_38 = arith.constant 0 : i32
      %76 = arith.cmpi ne, %75, %c0_i32_38 : i32
      scf.if %76 {
        %c0_39 = arith.constant 0 : index
        %c0_40 = arith.constant 0 : index
        %77 = vector.load %arg17[%c0_39, %c0_40] : memref<4x1xf32, #tpu.memory_space<vmem>>, vector<4x1xf32>
        %78 = tpu.reciprocal %77 {approx = true} : vector<4x1xf32> -> vector<4x1xf32>
        %c0_41 = arith.constant 0 : index
        %c0_42 = arith.constant 0 : index
        %79 = vector.load %arg18[%c0_41, %c0_42] : memref<4x32xf32, #tpu.memory_space<vmem>>, vector<4x32xf32>
        %80 = vector.broadcast %78 : vector<4x1xf32> to vector<4x32xf32>
        %81 = arith.mulf %79, %80 : vector<4x32xf32>
        %c0_43 = arith.constant 0 : index
        %c0_44 = arith.constant 0 : index
        %82 = vector.load %arg8[%c0_43, %c0_44] : memref<32x32xf32, #tpu.memory_space<vmem>>, vector<32x32xf32>
        %cst_45 = arith.constant dense<0.000000e+00> : vector<4x32xf32>
        %83 = tpu.matmul %81, %82, %cst_45 {dimension_numbers = #tpu.dot_dimension_numbers<[1], [0], [0], [1], [0, 0, 1, 1], [], []>} : vector<4x32xf32>, vector<32x32xf32>, vector<4x32xf32> -> vector<4x32xf32>
        %c0_46 = arith.constant 0 : index
        %c0_47 = arith.constant 0 : index
        %84 = vector.load %arg9[%c0_46, %c0_47] : memref<1x32xf32, #tpu.memory_space<vmem>>, vector<1x32xf32>
        %85 = vector.broadcast %84 : vector<1x32xf32> to vector<4x32xf32>
        %86 = arith.addf %83, %85 : vector<4x32xf32>
        %c0_48 = arith.constant 0 : index
        %c0_49 = arith.constant 0 : index
        %87 = vector.load %arg11[%c0_48, %c0_49] : memref<1x4xf32, #tpu.memory_space<vmem>>, vector<1x4xf32>
        %88 = vector.extract_strided_slice %86 {offsets = [0, 0], sizes = [1, 32], strides = [1, 1]} : vector<4x32xf32> to vector<1x32xf32>
        %c0_50 = arith.constant 0 : index
        %c0_51 = arith.constant 0 : index
        %c0_52 = arith.constant 0 : index
        %89 = vector.load %arg10[%c0_50, %c0_51, %c0_52] : memref<4x32x4xf32, #tpu.memory_space<vmem>>, vector<1x32x4xf32>
        %90 = vector.shape_cast %89 : vector<1x32x4xf32> to vector<32x4xf32>
        %cst_53 = arith.constant dense<0.000000e+00> : vector<1x4xf32>
        %91 = tpu.matmul %88, %90, %cst_53 {dimension_numbers = #tpu.dot_dimension_numbers<[1], [0], [0], [1], [0, 0, 1, 1], [], []>} : vector<1x32xf32>, vector<32x4xf32>, vector<1x4xf32> -> vector<1x4xf32>
        %92 = arith.addf %87, %91 : vector<1x4xf32>
        %93 = vector.extract_strided_slice %86 {offsets = [1, 0], sizes = [1, 32], strides = [1, 1]} : vector<4x32xf32> to vector<1x32xf32>
        %c1 = arith.constant 1 : index
        %c0_54 = arith.constant 0 : index
        %c0_55 = arith.constant 0 : index
        %94 = vector.load %arg10[%c1, %c0_54, %c0_55] : memref<4x32x4xf32, #tpu.memory_space<vmem>>, vector<1x32x4xf32>
        %95 = vector.shape_cast %94 : vector<1x32x4xf32> to vector<32x4xf32>
        %cst_56 = arith.constant dense<0.000000e+00> : vector<1x4xf32>
        %96 = tpu.matmul %93, %95, %cst_56 {dimension_numbers = #tpu.dot_dimension_numbers<[1], [0], [0], [1], [0, 0, 1, 1], [], []>} : vector<1x32xf32>, vector<32x4xf32>, vector<1x4xf32> -> vector<1x4xf32>
        %97 = arith.addf %92, %96 : vector<1x4xf32>
        %98 = vector.extract_strided_slice %86 {offsets = [2, 0], sizes = [1, 32], strides = [1, 1]} : vector<4x32xf32> to vector<1x32xf32>
        %c2 = arith.constant 2 : index
        %c0_57 = arith.constant 0 : index
        %c0_58 = arith.constant 0 : index
        %99 = vector.load %arg10[%c2, %c0_57, %c0_58] : memref<4x32x4xf32, #tpu.memory_space<vmem>>, vector<1x32x4xf32>
        %100 = vector.shape_cast %99 : vector<1x32x4xf32> to vector<32x4xf32>
        %cst_59 = arith.constant dense<0.000000e+00> : vector<1x4xf32>
        %101 = tpu.matmul %98, %100, %cst_59 {dimension_numbers = #tpu.dot_dimension_numbers<[1], [0], [0], [1], [0, 0, 1, 1], [], []>} : vector<1x32xf32>, vector<32x4xf32>, vector<1x4xf32> -> vector<1x4xf32>
        %102 = arith.addf %97, %101 : vector<1x4xf32>
        %103 = vector.extract_strided_slice %86 {offsets = [3, 0], sizes = [1, 32], strides = [1, 1]} : vector<4x32xf32> to vector<1x32xf32>
        %c3 = arith.constant 3 : index
        %c0_60 = arith.constant 0 : index
        %c0_61 = arith.constant 0 : index
        %104 = vector.load %arg10[%c3, %c0_60, %c0_61] : memref<4x32x4xf32, #tpu.memory_space<vmem>>, vector<1x32x4xf32>
        %105 = vector.shape_cast %104 : vector<1x32x4xf32> to vector<32x4xf32>
        %cst_62 = arith.constant dense<0.000000e+00> : vector<1x4xf32>
        %106 = tpu.matmul %103, %105, %cst_62 {dimension_numbers = #tpu.dot_dimension_numbers<[1], [0], [0], [1], [0, 0, 1, 1], [], []>} : vector<1x32xf32>, vector<32x4xf32>, vector<1x4xf32> -> vector<1x4xf32>
        %107 = arith.addf %102, %106 : vector<1x4xf32>
        %108 = tpu.iota {dimensions = array<i32: 0>} : vector<4x4xi32>
        %109 = tpu.iota {dimensions = array<i32: 1>} : vector<4x4xi32>
        %110 = arith.cmpi eq, %108, %109 : vector<4x4xi32>
        %111 = arith.extui %110 : vector<4x4xi1> to vector<4x4xi32>
        %112 = arith.sitofp %111 : vector<4x4xi32> to vector<4x4xf32>
        %c0_63 = arith.constant 0 : index
        %c0_64 = arith.constant 0 : index
        %113 = vector.load %arg13[%c0_63, %c0_64] : memref<4x1xf32, #tpu.memory_space<vmem>>, vector<4x1xf32>
        %114 = vector.broadcast %113 : vector<4x1xf32> to vector<4x4xf32>
        %115 = arith.mulf %114, %112 : vector<4x4xf32>
        %cst_65 = arith.constant dense<0.000000e+00> : vector<4xf32>
        %116 = vector.multi_reduction <add>, %115, %cst_65 [0] : vector<4x4xf32> to vector<4xf32>
        %117 = vector.shape_cast %116 : vector<4xf32> to vector<1x4xf32>
        %118 = arith.negf %117 : vector<1x4xf32>
        %119 = math.exp %118 : vector<1x4xf32>
        %cst_66 = arith.constant 1.000000e+00 : f32
        %120 = vector.broadcast %cst_66 : f32 to vector<1x4xf32>
        %121 = arith.addf %120, %119 : vector<1x4xf32>
        %122 = arith.divf %120, %121 : vector<1x4xf32>
        %123 = arith.negf %107 : vector<1x4xf32>
        %124 = math.exp %123 : vector<1x4xf32>
        %cst_67 = arith.constant 1.000000e+00 : f32
        %125 = vector.broadcast %cst_67 : f32 to vector<1x4xf32>
        %126 = arith.addf %125, %124 : vector<1x4xf32>
        %127 = arith.divf %125, %126 : vector<1x4xf32>
        %128 = arith.cmpi sle, %108, %109 : vector<4x4xi32>
        %129 = arith.extui %128 : vector<4x4xi1> to vector<4x4xi32>
        %130 = arith.sitofp %129 : vector<4x4xi32> to vector<4x4xf32>
        %cst_68 = arith.constant 1.000000e+00 : f32
        %131 = vector.broadcast %cst_68 : f32 to vector<1x4xf32>
        %132 = arith.subf %131, %122 : vector<1x4xf32>
        %cst_69 = arith.constant 1.000000e-30 : f32
        %133 = vector.broadcast %cst_69 : f32 to vector<1x4xf32>
        %134 = arith.maximumf %132, %133 : vector<1x4xf32>
        %135 = math.log %134 : vector<1x4xf32>
        %cst_70 = arith.constant dense<0.000000e+00> : vector<1x4xf32>
        %136 = tpu.matmul %135, %130, %cst_70 {dimension_numbers = #tpu.dot_dimension_numbers<[1], [0], [0], [1], [0, 0, 1, 1], [], []>} : vector<1x4xf32>, vector<4x4xf32>, vector<1x4xf32> -> vector<1x4xf32>
        %137 = math.exp %136 : vector<1x4xf32>
        %cst_71 = arith.constant 1.000000e+00 : f32
        %138 = vector.broadcast %cst_71 : f32 to vector<1x4xf32>
        %139 = arith.subf %138, %127 : vector<1x4xf32>
        %cst_72 = arith.constant 1.000000e-30 : f32
        %140 = vector.broadcast %cst_72 : f32 to vector<1x4xf32>
        %141 = arith.maximumf %139, %140 : vector<1x4xf32>
        %142 = math.log %141 : vector<1x4xf32>
        %cst_73 = arith.constant dense<0.000000e+00> : vector<1x4xf32>
        %143 = tpu.matmul %142, %130, %cst_73 {dimension_numbers = #tpu.dot_dimension_numbers<[1], [0], [0], [1], [0, 0, 1, 1], [], []>} : vector<1x4xf32>, vector<4x4xf32>, vector<1x4xf32> -> vector<1x4xf32>
        %144 = math.exp %143 : vector<1x4xf32>
        %c0_74 = arith.constant 0 : index
        %c0_75 = arith.constant 0 : index
        %145 = vector.load %arg12[%c0_74, %c0_75] : memref<6x4xf32, #tpu.memory_space<vmem>>, vector<1x4xf32>
        tpu.vector_store %arg12[%c0_74, %c0_75], %117 {strides = array<i32>} : memref<6x4xf32, #tpu.memory_space<vmem>>, vector<1x4xf32>,
        %c1_76 = arith.constant 1 : index
        %c0_77 = arith.constant 0 : index
        %146 = vector.load %arg12[%c1_76, %c0_77] : memref<6x4xf32, #tpu.memory_space<vmem>>, vector<1x4xf32>
        tpu.vector_store %arg12[%c1_76, %c0_77], %107 {strides = array<i32>} : memref<6x4xf32, #tpu.memory_space<vmem>>, vector<1x4xf32>,
        %c2_78 = arith.constant 2 : index
        %c0_79 = arith.constant 0 : index
        %147 = vector.load %arg12[%c2_78, %c0_79] : memref<6x4xf32, #tpu.memory_space<vmem>>, vector<1x4xf32>
        tpu.vector_store %arg12[%c2_78, %c0_79], %122 {strides = array<i32>} : memref<6x4xf32, #tpu.memory_space<vmem>>, vector<1x4xf32>,
        %c3_80 = arith.constant 3 : index
        %c0_81 = arith.constant 0 : index
        %148 = vector.load %arg12[%c3_80, %c0_81] : memref<6x4xf32, #tpu.memory_space<vmem>>, vector<1x4xf32>
        tpu.vector_store %arg12[%c3_80, %c0_81], %137 {strides = array<i32>} : memref<6x4xf32, #tpu.memory_space<vmem>>, vector<1x4xf32>,
        %c4 = arith.constant 4 : index
        %c0_82 = arith.constant 0 : index
        %149 = vector.load %arg12[%c4, %c0_82] : memref<6x4xf32, #tpu.memory_space<vmem>>, vector<1x4xf32>
        tpu.vector_store %arg12[%c4, %c0_82], %127 {strides = array<i32>} : memref<6x4xf32, #tpu.memory_space<vmem>>, vector<1x4xf32>,
        %c5 = arith.constant 5 : index
        %c0_83 = arith.constant 0 : index
        %150 = vector.load %arg12[%c5, %c0_83] : memref<6x4xf32, #tpu.memory_space<vmem>>, vector<1x4xf32>
        tpu.vector_store %arg12[%c5, %c0_83], %144 {strides = array<i32>} : memref<6x4xf32, #tpu.memory_space<vmem>>, vector<1x4xf32>,
      } else {
      }
    } else {
    }
    return
  }
  func.func @transform_0(%arg0: i32, %arg1: i32, %arg2: memref<1xi32, #tpu.memory_space<smem>>) -> (i32, i32) {
    %c0_i32 = arith.constant 0 : i32
    %c0_i32_0 = arith.constant 0 : i32
    return %arg1, %c0_i32 : i32, i32
  }
  func.func @transform_1(%arg0: i32, %arg1: i32, %arg2: memref<1xi32, #tpu.memory_space<smem>>) -> (i32, i32) {
    %c0_i32 = arith.constant 0 : i32
    %c0_i32_0 = arith.constant 0 : i32
    %c0_i32_1 = arith.constant 0 : i32
    return %c0_i32, %c0_i32_0 : i32, i32
  }
  func.func @transform_2(%arg0: i32, %arg1: i32, %arg2: memref<1xi32, #tpu.memory_space<smem>>) -> (i32, i32) {
    %c0_i32 = arith.constant 0 : i32
    %c0_i32_0 = arith.constant 0 : i32
    %c0_i32_1 = arith.constant 0 : i32
    return %c0_i32, %c0_i32_0 : i32, i32
  }
  func.func @transform_3(%arg0: i32, %arg1: i32, %arg2: memref<1xi32, #tpu.memory_space<smem>>) -> (i32, i32) {
    %c0_i32 = arith.constant 0 : i32
    %c0_i32_0 = arith.constant 0 : i32
    %c0_i32_1 = arith.constant 0 : i32
    return %c0_i32, %c0_i32_0 : i32, i32
  }
  func.func @transform_4(%arg0: i32, %arg1: i32, %arg2: memref<1xi32, #tpu.memory_space<smem>>) -> (i32, i32) {
    %c0_i32 = arith.constant 0 : i32
    %c0_i32_0 = arith.constant 0 : i32
    %c0_i32_1 = arith.constant 0 : i32
    return %c0_i32, %c0_i32_0 : i32, i32
  }
  func.func @transform_5(%arg0: i32, %arg1: i32, %arg2: memref<1xi32, #tpu.memory_space<smem>>) -> (i32, i32) {
    %c0_i32 = arith.constant 0 : i32
    %c0_i32_0 = arith.constant 0 : i32
    %c0_i32_1 = arith.constant 0 : i32
    return %c0_i32, %c0_i32_0 : i32, i32
  }
  func.func @transform_6(%arg0: i32, %arg1: i32, %arg2: memref<1xi32, #tpu.memory_space<smem>>) -> (i32, i32) {
    %c0_i32 = arith.constant 0 : i32
    %c0_i32_0 = arith.constant 0 : i32
    %c0_i32_1 = arith.constant 0 : i32
    return %c0_i32, %c0_i32_0 : i32, i32
  }
  func.func @transform_7(%arg0: i32, %arg1: i32, %arg2: memref<1xi32, #tpu.memory_space<smem>>) -> (i32, i32, i32) {
    %c0_i32 = arith.constant 0 : i32
    %c0_i32_0 = arith.constant 0 : i32
    %c0_i32_1 = arith.constant 0 : i32
    %c0_i32_2 = arith.constant 0 : i32
    return %c0_i32, %c0_i32_0, %c0_i32_1 : i32, i32, i32
  }
  func.func @transform_8(%arg0: i32, %arg1: i32, %arg2: memref<1xi32, #tpu.memory_space<smem>>) -> (i32, i32) {
    %c0_i32 = arith.constant 0 : i32
    %c0_i32_0 = arith.constant 0 : i32
    %c0_i32_1 = arith.constant 0 : i32
    return %c0_i32, %c0_i32_0 : i32, i32
  }
  func.func @transform_9(%arg0: i32, %arg1: i32, %arg2: memref<1xi32, #tpu.memory_space<smem>>) -> (i32, i32) {
    %c0_i32 = arith.constant 0 : i32
    %c0_i32_0 = arith.constant 0 : i32
    %c0_i32_1 = arith.constant 0 : i32
    return %c0_i32, %c0_i32_0 : i32, i32
  }
}

</mosaic_0001>

<llo_original>
// kernel: tpu_custom_call.1
$region0: #{tpu_custom_call.1}
  #allocation0 [shape = 'u32[]', space=smem, size = 0x4, offset = 0x4, fixed_abs, tag = 'smem constant byte address 0x4 - core index']
  #allocation1 [shape = 'u32[72,128]{1,0:T(1,128)}', space=vmem, size = 0x9000, scoped, tag = 'internal scratch']
  #allocation2 [shape = 'f32[4,1]{1,0:T(4,128)}', space=vmem, size = 0x800, scoped, tag = 'scratch operand']
  #allocation3 [shape = 'bf16[4,32]{1,0:T(4,128)(2,1)}', space=vmem, size = 0x400, scoped, tag = 'scratch operand']
  #allocation4 [shape = 'bf16[4,128]{1,0:T(4,128)(2,1)}', space=vmem, size = 0x400, scoped, tag = 'scratch operand']
  #allocation5 [shape = 'f32[4,1]{1,0:T(4,128)}', space=vmem, size = 0x800, scoped, tag = 'scratch operand']
  #allocation6 [shape = 'f32[4,1]{1,0:T(4,128)}', space=vmem, size = 0x800, scoped, tag = 'scratch operand']
  #allocation7 [shape = 'f32[4,32]{1,0:T(4,128)}', space=vmem, size = 0x800, scoped, tag = 'scratch operand']
  #allocation8 [shape = 's32[1]{0}', space=sflag, size = 0x4, scoped, tag = 'scoped memory for tpu_custom_call.1']
  #allocation9 [shape = 's32[1]{0:T(128)S(6)}', space=smem, size = 0x200, scoped, tag = 'prefetched SMEM operand 0']
  %s0 = inlined_call_operand.<no memory space> [shape: s32[1], index: 0, kind: input, shape index: {}]
  %s1 = inlined_call_operand.vmem [shape: bf16[24,32], index: 1, kind: input, shape index: {}]
  %s2 = inlined_call_operand.vmem [shape: f32[4,32], index: 2, kind: input, shape index: {}]
  %s3 = inlined_call_operand.vmem [shape: f32[4,1], index: 3, kind: input, shape index: {}]
  %s4 = inlined_call_operand.vmem [shape: bf16[32,160], index: 4, kind: input, shape index: {}]
  %s5 = inlined_call_operand.vmem [shape: f32[1,160], index: 5, kind: input, shape index: {}]
  %s6 = inlined_call_operand.vmem [shape: f32[32,32], index: 6, kind: input, shape index: {}]
  %s7 = inlined_call_operand.vmem [shape: f32[1,32], index: 7, kind: input, shape index: {}]
  %s8 = inlined_call_operand.vmem [shape: f32[4,32,4], index: 8, kind: input, shape index: {}]
  %s9 = inlined_call_operand.vmem [shape: f32[1,4], index: 9, kind: input, shape index: {}]
  %s10 = inlined_call_operand.vmem [shape: f32[6,4], index: 10, kind: output, shape index: {}]
  %s11 = sld [smem:[#allocation0]]
  $region89: #{tpu_custom_call.1} parent=0
    _
  %s13 = ssub.s32 1, %s11
  %s14 = scalar_select 0, %s13, %s11
  %15 = sst [smem:[#allocation9]] %s0
  loop: start=0, step=1, limit=4
  $region2: #{tpu_custom_call.1} parent=0 // loop_pre_header
    _
  $region3: #{tpu_custom_call.1} parent=0 // loop_header
    %s17 = sphi 0, %s21
    %p18 = scmp.ge.s32.totalorder %s17, 4
    %s24 = sphi 0, %s36
    %s25 = sphi 0, %s32
    %s26 = sphi 0, %s24
    %s27 = sphi 0, %s25
    %s28 = sphi 0, %s26
    %s29 = sphi 0, %s27
    %s39 = sphi 0, %s41
    %s42 = sphi 0, %s39
    %s43 = sphi 0, %s42
    %s59 = sphi 0, %s43
    %s63 = sphi 0, %s63
    %s65 = sphi 0, %s63
    %s66 = sphi 0, %s65
    %s80 = sphi 0, %s66
    %s84 = sphi 0, %s84
    %s86 = sphi 0, %s84
    %s87 = sphi 0, %s86
    %s101 = sphi 0, %s87
    %s105 = sphi 0, %s105
    %s107 = sphi 0, %s105
    %s108 = sphi 0, %s107
    %s122 = sphi 0, %s108
    %s126 = sphi 0, %s126
    %s128 = sphi 0, %s126
    %s129 = sphi 0, %s128
    %s143 = sphi 0, %s129
    %s147 = sphi 0, %s147
    %s149 = sphi 0, %s147
    %s150 = sphi 0, %s149
    %s164 = sphi 0, %s150
    %s168 = sphi 0, %s168
    %s170 = sphi 0, %s168
    %s171 = sphi 0, %s170
    %s185 = sphi 0, %s171
    %s189 = sphi 0, %s189
    %s191 = sphi 0, %s189
    %s192 = sphi 0, %s191
    %s206 = sphi 0, %s192
    %s210 = sphi 0, %s210
    %s212 = sphi 0, %s210
    %s213 = sphi 0, %s212
    %s227 = sphi 0, %s213
    %s231 = sphi 0, %s231
    %s233 = sphi 0, %s231
    %s234 = sphi 0, %s233
    %s248 = sphi 0, %s234
  $region4: #{tpu_custom_call.1} parent=0 // loop_header_branch
    %20 = sbr.rel (%p18) target = $region8
  $region5: #{tpu_custom_call.1} parent=0 // loop_body
    %s22 = ssub.s32 %s17, 1
    %s23 = ssub.s32 %s17, 2
    %s30 = sadd.s32 1, %s25
    %p31 = scmp.ge.s32.totalorder %s30, 1
    %s32 = scalar_select %p31, 0, %s30
    %s33 = sadd.s32 1, %s24
    %s34 = scalar_select %p31, %s33, %s24
    %p35 = scmp.ge.s32.totalorder %s34, 2
    %s36 = scalar_select %p35, 0, %s34
    %s37 = ssub.s32 %s25, %s32
    %p38 = scmp.eq.s32.totalorder %s37, 0
    %s40 = sadd.s32 %s39, 1
    %s41 = scalar_select %p38, %s39, %s40
    %p44 = pneg %p38
    %p45 = scmp.eq.s32.totalorder %s17, 1
    %p46 = por %p44, %p45
    %p47 = scmp.ne.s32.totalorder %s39, %s42
    %p48 = scmp.eq.s32.totalorder %s17, 0
    %p49 = por %p47, %p48
    %p50 = scmp.ne.s32.totalorder %s39, %s42
    %p51 = scmp.eq.s32.totalorder %s22, 1
    %p52 = por %p50, %p51
    %p53 = scmp.ne.s32.totalorder %s42, %s43
    %p54 = scmp.eq.s32.totalorder %s22, 0
    %p55 = por %p53, %p54
    %p56 = scmp.ne.s32.totalorder %s42, %s43
    %p57 = scmp.eq.s32.totalorder %s23, 1
    %p58 = por %p56, %p57
    %p60 = scmp.ne.s32.totalorder %s43, %s59
    %p61 = scmp.eq.s32.totalorder %s23, 0
    %p62 = por %p60, %p61
    %s64 = sadd.s32 %s63, 1
    %p67 = scmp.eq.s32.totalorder %s17, 1
    %p68 = scmp.ne.s32.totalorder %s63, %s65
    %p69 = scmp.eq.s32.totalorder %s17, 0
    %p70 = por %p68, %p69
    %p71 = scmp.ne.s32.totalorder %s63, %s65
    %p72 = scmp.eq.s32.totalorder %s22, 1
    %p73 = por %p71, %p72
    %p74 = scmp.ne.s32.totalorder %s65, %s66
    %p75 = scmp.eq.s32.totalorder %s22, 0
    %p76 = por %p74, %p75
    %p77 = scmp.ne.s32.totalorder %s65, %s66
    %p78 = scmp.eq.s32.totalorder %s23, 1
    %p79 = por %p77, %p78
    %p81 = scmp.ne.s32.totalorder %s66, %s80
    %p82 = scmp.eq.s32.totalorder %s23, 0
    %p83 = por %p81, %p82
    %s85 = sadd.s32 %s84, 1
    %p88 = scmp.eq.s32.totalorder %s17, 1
    %p89 = scmp.ne.s32.totalorder %s84, %s86
    %p90 = scmp.eq.s32.totalorder %s17, 0
    %p91 = por %p89, %p90
    %p92 = scmp.ne.s32.totalorder %s84, %s86
    %p93 = scmp.eq.s32.totalorder %s22, 1
    %p94 = por %p92, %p93
    %p95 = scmp.ne.s32.totalorder %s86, %s87
    %p96 = scmp.eq.s32.totalorder %s22, 0
    %p97 = por %p95, %p96
    %p98 = scmp.ne.s32.totalorder %s86, %s87
    %p99 = scmp.eq.s32.totalorder %s23, 1
    %p100 = por %p98, %p99
    %p102 = scmp.ne.s32.totalorder %s87, %s101
    %p103 = scmp.eq.s32.totalorder %s23, 0
    %p104 = por %p102, %p103
    %s106 = sadd.s32 %s105, 1
    %p109 = scmp.eq.s32.totalorder %s17, 1
    %p110 = scmp.ne.s32.totalorder %s105, %s107
    %p111 = scmp.eq.s32.totalorder %s17, 0
    %p112 = por %p110, %p111
    %p113 = scmp.ne.s32.totalorder %s105, %s107
    %p114 = scmp.eq.s32.totalorder %s22, 1
    %p115 = por %p113, %p114
    %p116 = scmp.ne.s32.totalorder %s107, %s108
    %p117 = scmp.eq.s32.totalorder %s22, 0
    %p118 = por %p116, %p117
    %p119 = scmp.ne.s32.totalorder %s107, %s108
    %p120 = scmp.eq.s32.totalorder %s23, 1
    %p121 = por %p119, %p120
    %p123 = scmp.ne.s32.totalorder %s108, %s122
    %p124 = scmp.eq.s32.totalorder %s23, 0
    %p125 = por %p123, %p124
    %s127 = sadd.s32 %s126, 1
    %p130 = scmp.eq.s32.totalorder %s17, 1
    %p131 = scmp.ne.s32.totalorder %s126, %s128
    %p132 = scmp.eq.s32.totalorder %s17, 0
    %p133 = por %p131, %p132
    %p134 = scmp.ne.s32.totalorder %s126, %s128
    %p135 = scmp.eq.s32.totalorder %s22, 1
    %p136 = por %p134, %p135
    %p137 = scmp.ne.s32.totalorder %s128, %s129
    %p138 = scmp.eq.s32.totalorder %s22, 0
    %p139 = por %p137, %p138
    %p140 = scmp.ne.s32.totalorder %s128, %s129
    %p141 = scmp.eq.s32.totalorder %s23, 1
    %p142 = por %p140, %p141
    %p144 = scmp.ne.s32.totalorder %s129, %s143
    %p145 = scmp.eq.s32.totalorder %s23, 0
    %p146 = por %p144, %p145
    %s148 = sadd.s32 %s147, 1
    %p151 = scmp.eq.s32.totalorder %s17, 1
    %p152 = scmp.ne.s32.totalorder %s147, %s149
    %p153 = scmp.eq.s32.totalorder %s17, 0
    %p154 = por %p152, %p153
    %p155 = scmp.ne.s32.totalorder %s147, %s149
    %p156 = scmp.eq.s32.totalorder %s22, 1
    %p157 = por %p155, %p156
    %p158 = scmp.ne.s32.totalorder %s149, %s150
    %p159 = scmp.eq.s32.totalorder %s22, 0
    %p160 = por %p158, %p159
    %p161 = scmp.ne.s32.totalorder %s149, %s150
    %p162 = scmp.eq.s32.totalorder %s23, 1
    %p163 = por %p161, %p162
    %p165 = scmp.ne.s32.totalorder %s150, %s164
    %p166 = scmp.eq.s32.totalorder %s23, 0
    %p167 = por %p165, %p166
    %s169 = sadd.s32 %s168, 1
    %p172 = scmp.eq.s32.totalorder %s17, 1
    %p173 = scmp.ne.s32.totalorder %s168, %s170
    %p174 = scmp.eq.s32.totalorder %s17, 0
    %p175 = por %p173, %p174
    %p176 = scmp.ne.s32.totalorder %s168, %s170
    %p177 = scmp.eq.s32.totalorder %s22, 1
    %p178 = por %p176, %p177
    %p179 = scmp.ne.s32.totalorder %s170, %s171
    %p180 = scmp.eq.s32.totalorder %s22, 0
    %p181 = por %p179, %p180
    %p182 = scmp.ne.s32.totalorder %s170, %s171
    %p183 = scmp.eq.s32.totalorder %s23, 1
    %p184 = por %p182, %p183
    %p186 = scmp.ne.s32.totalorder %s171, %s185
    %p187 = scmp.eq.s32.totalorder %s23, 0
    %p188 = por %p186, %p187
    %s190 = sadd.s32 %s189, 1
    %p193 = scmp.eq.s32.totalorder %s17, 1
    %p194 = scmp.ne.s32.totalorder %s189, %s191
    %p195 = scmp.eq.s32.totalorder %s17, 0
    %p196 = por %p194, %p195
    %p197 = scmp.ne.s32.totalorder %s189, %s191
    %p198 = scmp.eq.s32.totalorder %s22, 1
    %p199 = por %p197, %p198
    %p200 = scmp.ne.s32.totalorder %s191, %s192
    %p201 = scmp.eq.s32.totalorder %s22, 0
    %p202 = por %p200, %p201
    %p203 = scmp.ne.s32.totalorder %s191, %s192
    %p204 = scmp.eq.s32.totalorder %s23, 1
    %p205 = por %p203, %p204
    %p207 = scmp.ne.s32.totalorder %s192, %s206
    %p208 = scmp.eq.s32.totalorder %s23, 0
    %p209 = por %p207, %p208
    %s211 = sadd.s32 %s210, 1
    %p214 = scmp.eq.s32.totalorder %s17, 1
    %p215 = scmp.ne.s32.totalorder %s210, %s212
    %p216 = scmp.eq.s32.totalorder %s17, 0
    %p217 = por %p215, %p216
    %p218 = scmp.ne.s32.totalorder %s210, %s212
    %p219 = scmp.eq.s32.totalorder %s22, 1
    %p220 = por %p218, %p219
    %p221 = scmp.ne.s32.totalorder %s212, %s213
    %p222 = scmp.eq.s32.totalorder %s22, 0
    %p223 = por %p221, %p222
    %p224 = scmp.ne.s32.totalorder %s212, %s213
    %p225 = scmp.eq.s32.totalorder %s23, 1
    %p226 = por %p224, %p225
    %p228 = scmp.ne.s32.totalorder %s213, %s227
    %p229 = scmp.eq.s32.totalorder %s23, 0
    %p230 = por %p228, %p229
    %s232 = sadd.s32 %s231, 1
    %p235 = scmp.eq.s32.totalorder %s17, 1
    %p236 = scmp.ne.s32.totalorder %s231, %s233
    %p237 = scmp.eq.s32.totalorder %s17, 0
    %p238 = por %p236, %p237
    %p239 = scmp.ne.s32.totalorder %s231, %s233
    %p240 = scmp.eq.s32.totalorder %s22, 1
    %p241 = por %p239, %p240
    %p242 = scmp.ne.s32.totalorder %s233, %s234
    %p243 = scmp.eq.s32.totalorder %s22, 0
    %p244 = por %p242, %p243
    %p245 = scmp.ne.s32.totalorder %s233, %s234
    %p246 = scmp.eq.s32.totalorder %s23, 1
    %p247 = por %p245, %p246
    %p249 = scmp.ne.s32.totalorder %s234, %s248
    %p250 = scmp.eq.s32.totalorder %s23, 0
    %p251 = por %p249, %p250
    %p252 = scmp.le.s32.totalorder 1, %s17
    %p253 = scmp.lt.s32.totalorder %s17, 3
    %p254 = pnand %p252, %p253
    %p255 = pneg %p254
    // Predicated region
    $region9: #{tpu_custom_call.1} parent=5 // pred_check
      _
    $region10: #{tpu_custom_call.1} parent=5 // pred_check_branch
      %257 = sbr.rel (%p254) target = $region12
    $region11: #{tpu_custom_call.1} parent=5 // pred_region
      %s258 = ssub.s32 %s17, 1
      // Predicated region
      $region13: #{tpu_custom_call.1} parent=11 // pred_check
        %p259 = pneg %p55
      $region14: #{tpu_custom_call.1} parent=11 // pred_check_branch
        %261 = sbr.rel (%p259) target = $region16
      $region15: #{tpu_custom_call.1} parent=11 // pred_region
        %s262 = smul.u32 3, %s27
        %p263 = scmp.lt.s32.totalorder %s262, 2
        %s264 = scalar_select %p263, %s262, 2
        %s265 = smul.addr %s264, 4
        %s266 = scalar_lea.vmem %s1, %s265
        %s267 = smul.u32 3, %s27
      $region16: #{tpu_custom_call.1} parent=11 // pred_fallthru
        _
      // Predicated region
      $region17: #{tpu_custom_call.1} parent=11 // pred_check
        %p268 = pneg %p76
      $region18: #{tpu_custom_call.1} parent=11 // pred_check_branch
        %270 = sbr.rel (%p268) target = $region20
      $region19: #{tpu_custom_call.1} parent=11 // pred_region
        _
      $region20: #{tpu_custom_call.1} parent=11 // pred_fallthru
        _
      // Predicated region
      $region21: #{tpu_custom_call.1} parent=11 // pred_check
        %p271 = pneg %p97
      $region22: #{tpu_custom_call.1} parent=11 // pred_check_branch
        %273 = sbr.rel (%p271) target = $region24
      $region23: #{tpu_custom_call.1} parent=11 // pred_region
        _
      $region24: #{tpu_custom_call.1} parent=11 // pred_fallthru
        _
      // Predicated region
      $region25: #{tpu_custom_call.1} parent=11 // pred_check
        %p274 = pneg %p118
      $region26: #{tpu_custom_call.1} parent=11 // pred_check_branch
        %276 = sbr.rel (%p274) target = $region28
      $region27: #{tpu_custom_call.1} parent=11 // pred_region
        _
      $region28: #{tpu_custom_call.1} parent=11 // pred_fallthru
        _
      // Predicated region
      $region29: #{tpu_custom_call.1} parent=11 // pred_check
        %p277 = pneg %p139
      $region30: #{tpu_custom_call.1} parent=11 // pred_check_branch
        %279 = sbr.rel (%p277) target = $region32
      $region31: #{tpu_custom_call.1} parent=11 // pred_region
        _
      $region32: #{tpu_custom_call.1} parent=11 // pred_fallthru
        _
      // Predicated region
      $region33: #{tpu_custom_call.1} parent=11 // pred_check
        %p280 = pneg %p160
      $region34: #{tpu_custom_call.1} parent=11 // pred_check_branch
        %282 = sbr.rel (%p280) target = $region36
      $region35: #{tpu_custom_call.1} parent=11 // pred_region
        _
      $region36: #{tpu_custom_call.1} parent=11 // pred_fallthru
        _
      // Predicated region
      $region37: #{tpu_custom_call.1} parent=11 // pred_check
        %p283 = pneg %p181
      $region38: #{tpu_custom_call.1} parent=11 // pred_check_branch
        %285 = sbr.rel (%p283) target = $region40
      $region39: #{tpu_custom_call.1} parent=11 // pred_region
        _
      $region40: #{tpu_custom_call.1} parent=11 // pred_fallthru
        _
      // Predicated region
      $region41: #{tpu_custom_call.1} parent=11 // pred_check
        %p286 = pneg %p202
      $region42: #{tpu_custom_call.1} parent=11 // pred_check_branch
        %288 = sbr.rel (%p286) target = $region44
      $region43: #{tpu_custom_call.1} parent=11 // pred_region
        _
      $region44: #{tpu_custom_call.1} parent=11 // pred_fallthru
        _
      // Predicated region
      $region45: #{tpu_custom_call.1} parent=11 // pred_check
        %p289 = pneg %p223
      $region46: #{tpu_custom_call.1} parent=11 // pred_check_branch
        %291 = sbr.rel (%p289) target = $region48
      $region47: #{tpu_custom_call.1} parent=11 // pred_region
        _
      $region48: #{tpu_custom_call.1} parent=11 // pred_fallthru
        _
    $region12: #{tpu_custom_call.1} parent=5 // pred_fallthru
      _
    %p292 = scmp.lt.s32.totalorder %s17, 2
    // Predicated region
    $region49: #{tpu_custom_call.1} parent=5 // pred_check
      %p293 = pneg %p292
    $region50: #{tpu_custom_call.1} parent=5 // pred_check_branch
      %295 = sbr.rel (%p293) target = $region52
    $region51: #{tpu_custom_call.1} parent=5 // pred_region
      _
    $region52: #{tpu_custom_call.1} parent=5 // pred_fallthru
      _
    %p296 = scmp.le.s32.totalorder 1, %s17
    %p297 = scmp.lt.s32.totalorder %s17, 3
    %p298 = pnand %p296, %p297
    %p299 = pneg %p298
    // Predicated region
    $region53: #{tpu_custom_call.1} parent=5 // pred_check
      _
    $region54: #{tpu_custom_call.1} parent=5 // pred_check_branch
      %301 = sbr.rel (%p298) target = $region56
    $region55: #{tpu_custom_call.1} parent=5 // pred_region
      %s302 = ssub.s32 %s17, 1
      %s303 = smul.u32 3, %s27
      %p304 = scmp.lt.s32.totalorder %s303, 2
      %s305 = scalar_select %p304, %s303, 2
      %s306 = smul.addr %s305, 4
      %s307 = scalar_lea.vmem %s1, %s306
      %p308 = pneg %p55
      %p309 = pneg %p52
      %p310 = pneg %p76
      %p311 = pneg %p73
      %p312 = pneg %p97
      %p313 = pneg %p94
      %p314 = pneg %p118
      %p315 = pneg %p115
      %p316 = pneg %p139
      %p317 = pneg %p136
      %p318 = pneg %p160
      %p319 = pneg %p157
      %p320 = pneg %p181
      %p321 = pneg %p178
      %p322 = pneg %p202
      %p323 = pneg %p199
      %p324 = pneg %p223
      %p325 = pneg %p220
      %p326 = pneg %p244
      %p327 = pneg %p241
      %s328 = smul.u32 3, %s27
      %p329 = scmp.lt.s32.totalorder %s328, 2
      %s330 = scalar_select %p329, %s328, 2
      %s331 = smul.addr %s330, 4
      %s332 = scalar_lea.vmem %s1, %s331
      %s333 = smul.u32 3, %s27
      %s335 = sld [smem:[#allocation9]]
      %v336 = vlaneseq
      %v337 = vand.u32 %v336, 127
      %s338 = smul.u32 %s27, 24
      %v339 = vstv %s338
      %v340 = vadd.s32 %v339, %v337
      %v341 = vstv %s335
      %vm342 = vcmp.lt.s32.totalorder %v340, %v341
      %v343 = vld [vmem:[%s332] sm:$0xf]
      %v344 = vld [vmem:[%s332 + $0x4] sm:$0xf]
      %v345 = vld [vmem:[%s332 + $0x8] sm:$0xf]
      %p346 = scmp.eq.s32.totalorder %s26, 0
      // Predicated region
      $region57: #{tpu_custom_call.1} parent=55 // pred_check
        %p347 = pneg %p346
      $region58: #{tpu_custom_call.1} parent=55 // pred_check_branch
        %349 = sbr.rel (%p347) target = $region60
      $region59: #{tpu_custom_call.1} parent=55 // pred_region
        %p350 = scmp.eq.s32.totalorder %s27, 0
        // Predicated region
        $region61: #{tpu_custom_call.1} parent=59 // pred_check
          %p351 = pneg %p350
        $region62: #{tpu_custom_call.1} parent=59 // pred_check_branch
          %353 = sbr.rel (%p351) target = $region64
        $region63: #{tpu_custom_call.1} parent=59 // pred_region
          %vm354 = vcmask 3072
          %355 = vst.msk [vmem:[#allocation2] sm:$0xf] %vm354, -1e+30
          %vm356 = vcmask 254976
          %357 = vst.msk [vmem:[#allocation3] sm:$0x3] %vm356, 0
        $region64: #{tpu_custom_call.1} parent=59 // pred_fallthru
          _
        %v358 = vunpack.c.l.bf16 %v343
        %v359 = vunpack.c.l.bf16 %v344
        %v360 = vunpack.c.l.bf16 %v345
        %v361 = vld [vmem:[%s2] sm:$0xf]
        %v362 = vld [vmem:[%s3] sm:$0xf]
        %364 = vset.pattern.permute.xlu0 0
        %365 = vperm.xlu0 %364, %v362
        %v366 = vpop.permute.xlu0 %365
        %vm368 = vcmask 261120
        %v370 = vsel %vm368, %v361, 0
        %v373 = vsel %vm368, %v358, 0
        %v376 = vsel %vm368, %v359, 0
        %v379 = vsel %vm368, %v360, 0
        %381 = vmatpush.xpose.msra.mxu0 0.0
        %382 = vmatpush.xpose.msra.mxu0 0.0
        %383 = vmatpush.xpose.msra.mxu0 0.0
        %384 = vmatpush.xpose.msra.mxu0 0.0
        %385 = vmatpush.xpose.msra.mxu0 0.0
        %386 = vmatpush.xpose.msra.mxu0 0.0
        %387 = vmatpush.xpose.msra.mxu0 0.0
        %388 = vmatpush.xpose.msra.mxu0 0.0
        %389 = vmatpush.xpose.msra.mxu0 0.0
        %390 = vmatpush.xpose.msra.mxu0 0.0
        %391 = vmatpush.xpose.msra.mxu0 0.0
        %392 = vmatpush.xpose.msra.mxu0 0.0
        %393 = vmatpush.xpose.msra.mxu0 0.0
        %394 = vmatpush.xpose.msra.mxu0 %v379
        %395 = vmatpush.xpose.msra.mxu0 %v376
        %396 = vmatpush.xpose.msra.mxu0 %v373
        %397 = vmatmul.f32.gmra.mxu0 %v370
        %v398 = vpop.f32.mrf.mxu0
        %v399 = vadd.f32 %v366, %v398
        %400 = vdwg.mxu0
        %v401 = vsel %vm342, %v399, -1e+30
        %vm402 = vcmask 191488
        %v403 = vsel %vm402, %v401, -inf
        %404 = vmax.xlane.f32.xlu0 %v403
        %v405 = vpop.xlane.xlu0 %404
        %v406 = vcvt.s32.f32 %v337
        %vm407 = vcmp.eq.f32.partialorder %v401, %v405
        %v408 = vsel %vm407, %v406, 24.0
        %v409 = vsel %vm402, %v408, inf
        %410 = vmin.xlane.f32.xlu0 %v409
        %v411 = vpop.xlane.xlu0 %410
        %vm412 = vcmp.eq.f32.partialorder %v406, %v411
        %v413 = vsel %vm412, 1, 0
        %v414 = vcvt.s32.f32 %v413
        %v415 = vpack.c.bf16 %v414, %v414
        %v419 = vunpack.c.l.b16 %v343
        %v420 = vunpack.c.l.b16 %v344
        %v421 = vunpack.c.l.b16 %v345
        %v422 = vpack.c.b16 %v420, %v419
        %v423 = vpack.c.b16 %v421, %v421
        %vm425 = vcmask 195584
        %v427 = vsel %vm425, %v415, 0
        %vm429 = vcmask 1043456
        %v431 = vsel %vm429, %v423, 0
        %433 = vmatpush.bf16.msra.mxu0 0
        %434 = vmatpush.bf16.msra.mxu0 0
        %435 = vmatpush.bf16.msra.mxu0 0
        %436 = vmatpush.bf16.msra.mxu0 0
        %437 = vmatpush.bf16.msra.mxu0 0
        %438 = vmatpush.bf16.msra.mxu0 0
        %439 = vmatpush.bf16.msra.mxu0 %v431
        %440 = vmatpush.bf16.msra.mxu0 %v422
        %441 = vmatmul.bf16.gmra.mxu0 %v427
        %v442 = vpop.f32.mrf.mxu0
        %v443 = vadd.f32 0.0, %v442
        %v444 = vpop.f32.mrf.mxu0
        %445 = vdwg.mxu0
        %v446 = vld [vmem:[#allocation2] sm:$0xf]
        %vm447 = vcmp.gt.f32.partialorder %v405, %v446
        %v448 = vsel %vm447, %v405, %v446
        %vm449 = vcmask 3072
        %450 = vst.msk [vmem:[#allocation2] sm:$0xf] %vm449, %v448
        %v451 = vpack.c.bf16 %v443, %v443
        %v452 = vld [vmem:[#allocation3] sm:$0x3]
        %v453 = vsel %vm447, 1, 0
        %454 = vset.pattern.permute.xlu0 0
        %455 = vperm.xlu0 %454, %v453
        %v456 = vpop.permute.xlu0 %455
        %vm457 = vcmp.eq.s32.totalorder %v456, 1
        %vm458 = vmpackc.low %vm457, %vm457
        %v459 = vsel %vm458, %v451, %v452
        %vm460 = vcmask 254976
        %461 = vst.msk [vmem:[#allocation3] sm:$0x3] %vm460, %v459
      $region60: #{tpu_custom_call.1} parent=55 // pred_fallthru
        _
      %p462 = scmp.eq.s32.totalorder %s26, 1
      // Predicated region
      $region65: #{tpu_custom_call.1} parent=55 // pred_check
        %p463 = pneg %p462
      $region66: #{tpu_custom_call.1} parent=55 // pred_check_branch
        %465 = sbr.rel (%p463) target = $region68
      $region67: #{tpu_custom_call.1} parent=55 // pred_region
        %p466 = scmp.eq.s32.totalorder %s27, 0
        // Predicated region
        $region69: #{tpu_custom_call.1} parent=67 // pred_check
          %p467 = pneg %p466
        $region70: #{tpu_custom_call.1} parent=67 // pred_check_branch
          %469 = sbr.rel (%p467) target = $region72
        $region71: #{tpu_custom_call.1} parent=67 // pred_region
          %vm470 = vcmask 3072
          %471 = vst.msk [vmem:[#allocation5] sm:$0xf] %vm470, -1e+30
          %472 = vst.msk [vmem:[#allocation6] sm:$0xf] %vm470, 0.0
          %vm473 = vcmask 257024
          %474 = vst.msk [vmem:[#allocation7] sm:$0xf] %vm473, 0.0
          %v475 = vld [vmem:[#allocation3] sm:$0x3]
          %v476 = vld [vmem:[%s4] sm:$0xf]
          %v477 = vld [vmem:[%s4 + $0x8] sm:$0xf]
          %v478 = vld [vmem:[%s4 + $0x10] sm:$0xf]
          %v479 = vld [vmem:[%s4 + $0x18] sm:$0xf]
          %v480 = vld [vmem:[%s5] sm:$0x1]
          %v482 = vperm.slane %v480, 0
          %v488 = vunpack.c.l.b16 %v476
          %v489 = vunpack.c.l.b16 %v477
          %v490 = vunpack.c.l.b16 %v478
          %v491 = vunpack.c.l.b16 %v479
          %v492 = vpack.c.b16 %v489, %v488
          %v493 = vpack.c.b16 %v491, %v490
          %vm496 = vcmask 261120
          %v498 = vsel %vm496, %v475, 0
          %500 = vmatpush.bf16.msra.mxu0 0
          %501 = vmatpush.bf16.msra.mxu0 0
          %502 = vmatpush.bf16.msra.mxu0 0
          %503 = vmatpush.bf16.msra.mxu0 0
          %504 = vmatpush.bf16.msra.mxu0 0
          %505 = vmatpush.bf16.msra.mxu0 0
          %506 = vmatpush.bf16.msra.mxu0 %v493
          %507 = vmatpush.bf16.msra.mxu0 %v492
          %508 = vmatmul.bf16.gmra.mxu0 %v498
          %v509 = vpop.f32.mrf.mxu0
          %v510 = vadd.f32 %v482, %v509
          %v511 = vpop.f32.mrf.mxu0
          %512 = vdwg.mxu0
          %v513 = vpack.c.bf16 %v510, %v510
          %514 = vst [vmem:[#allocation4] sm:$0x3] %v513
        $region72: #{tpu_custom_call.1} parent=67 // pred_fallthru
          _
        %v515 = vld [vmem:[%s4] sm:$0xff]
        %v516 = vld [vmem:[%s4 + $0x8] sm:$0xff]
        %v517 = vld [vmem:[%s4 + $0x10] sm:$0xff]
        %v518 = vld [vmem:[%s4 + $0x18] sm:$0xff]
        %v519 = vld [vmem:[%s5] sm:$0x3]
        %v521 = vperm.slane %v519, 0
        %v522 = vperm.slane %v519, 1
        %v528 = vunpack.c.l.b16 %v343
        %v529 = vunpack.c.l.b16 %v344
        %v530 = vunpack.c.l.b16 %v345
        %v531 = vpack.c.b16 %v529, %v528
        %v532 = vpack.c.b16 %v530, %v530
        %v537 = vunpack.c.l.b16 %v515
        %v538 = vunpack.c.h.b16 %v515
        %v539 = vunpack.c.l.b16 %v516
        %v540 = vunpack.c.h.b16 %v516
        %v541 = vunpack.c.l.b16 %v517
        %v542 = vunpack.c.h.b16 %v517
        %v543 = vunpack.c.l.b16 %v518
        %v544 = vunpack.c.h.b16 %v518
        %v545 = vpack.c.b16 %v539, %v537
        %v546 = vpack.c.b16 %v540, %v538
        %v547 = vpack.c.b16 %v543, %v541
        %v548 = vpack.c.b16 %v544, %v542
        %vm553 = vcmask 261120
        %v555 = vsel %vm553, %v531, 0
        %v558 = vsel %vm553, %v532, 0
        %560 = vmatpush.bf16.msra.mxu0 0
        %561 = vmatpush.bf16.msra.mxu0 0
        %562 = vmatpush.bf16.msra.mxu0 0
        %563 = vmatpush.bf16.msra.mxu0 0
        %564 = vmatpush.bf16.msra.mxu0 0
        %565 = vmatpush.bf16.msra.mxu0 0
        %566 = vmatpush.bf16.msra.mxu0 %v547
        %567 = vmatpush.bf16.msra.mxu0 %v545
        %568 = vmatmul.bf16.gmra.mxu0 %v555
        %v569 = vpop.f32.mrf.mxu0
        %v570 = vadd.f32 %v521, %v569
        %v571 = vpop.f32.mrf.mxu0
        %v572 = vadd.f32 %v521, %v571
        %573 = vmatmul.bf16.gmra.mxu0 %v558
        %v574 = vpop.f32.mrf.mxu0
        %v575 = vadd.f32 %v521, %v574
        %v576 = vpop.f32.mrf.mxu0
        %577 = vdwg.mxu0
        %578 = vmatpush.bf16.msra.mxu0 0
        %579 = vmatpush.bf16.msra.mxu0 0
        %580 = vmatpush.bf16.msra.mxu0 0
        %581 = vmatpush.bf16.msra.mxu0 0
        %582 = vmatpush.bf16.msra.mxu0 0
        %583 = vmatpush.bf16.msra.mxu0 0
        %584 = vmatpush.bf16.msra.mxu0 %v548
        %585 = vmatpush.bf16.msra.mxu0 %v546
        %586 = vmatmul.bf16.gmra.mxu0 %v555
        %v587 = vpop.f32.mrf.mxu0
        %v588 = vadd.f32 %v522, %v587
        %v589 = vpop.f32.mrf.mxu0
        %v590 = vadd.f32 %v522, %v589
        %591 = vmatmul.bf16.gmra.mxu0 %v558
        %v592 = vpop.f32.mrf.mxu0
        %v593 = vadd.f32 %v522, %v592
        %v594 = vpop.f32.mrf.mxu0
        %595 = vdwg.mxu0
        %v596 = vmax.f32 %v588, 0.0
        %v597 = vmax.f32 %v590, 0.0
        %v598 = vmax.f32 %v593, 0.0
        %v599 = vmul.f32 %v570, %v570
        %v600 = vmul.f32 %v572, %v572
        %v601 = vmul.f32 %v575, %v575
        %602 = vadd.xlane.f32.xlu0 %v599
        %v603 = vpop.xlane.xlu0 %602
        %604 = vadd.xlane.f32.xlu0 %v600
        %v605 = vpop.xlane.xlu0 %604
        %606 = vadd.xlane.f32.xlu0 %v601
        %v607 = vpop.xlane.xlu0 %606
        %v608 = vmax.f32 %v603, 1e-24
        %v609 = vmax.f32 %v605, 1e-24
        %v610 = vmax.f32 %v607, 1e-24
        %v611 = vrsqrt.pop %v608
        %v612 = vmul.f32 %v611, %v608
        %v613 = vmul.f32 %v612, %v611
        %v614 = vmul.f32 0.5, %v613
        %v615 = vsub.f32 1.5, %v614
        %v616 = vmul.f32 %v611, %v615
        %vm617 = vweird.f32 %v608
        %vm618 = vweird.f32 %v611
        %vm619 = vmor %vm617, %vm618
        %v620 = vsel %vm619, %v611, %v616
        %v621 = vrsqrt.pop %v609
        %v622 = vmul.f32 %v621, %v609
        %v623 = vmul.f32 %v622, %v621
        %v624 = vmul.f32 0.5, %v623
        %v625 = vsub.f32 1.5, %v624
        %v626 = vmul.f32 %v621, %v625
        %vm627 = vweird.f32 %v609
        %vm628 = vweird.f32 %v621
        %vm629 = vmor %vm627, %vm628
        %v630 = vsel %vm629, %v621, %v626
        %v631 = vrsqrt.pop %v610
        %v632 = vmul.f32 %v631, %v610
        %v633 = vmul.f32 %v632, %v631
        %v634 = vmul.f32 0.5, %v633
        %v635 = vsub.f32 1.5, %v634
        %v636 = vmul.f32 %v631, %v635
        %vm637 = vweird.f32 %v610
        %vm638 = vweird.f32 %v631
        %vm639 = vmor %vm637, %vm638
        %v640 = vsel %vm639, %v631, %v636
        %v641 = vmul.f32 %v570, %v620
        %v642 = vmul.f32 %v572, %v630
        %v643 = vmul.f32 %v575, %v640
        %v644 = vmul.f32 %v596, %v596
        %v645 = vmul.f32 %v597, %v597
        %v646 = vmul.f32 %v598, %v598
        %v647 = vsel %vm553, %v644, 0.0
        %648 = vadd.xlane.f32.xlu0 %v647
        %v649 = vpop.xlane.xlu0 %648
        %v650 = vsel %vm553, %v645, 0.0
        %651 = vadd.xlane.f32.xlu0 %v650
        %v652 = vpop.xlane.xlu0 %651
        %v653 = vsel %vm553, %v646, 0.0
        %654 = vadd.xlane.f32.xlu0 %v653
        %v655 = vpop.xlane.xlu0 %654
        %v656 = vmax.f32 %v649, 1e-24
        %v657 = vmax.f32 %v652, 1e-24
        %v658 = vmax.f32 %v655, 1e-24
        %v659 = vrsqrt.pop %v656
        %v660 = vmul.f32 %v659, %v656
        %v661 = vmul.f32 %v660, %v659
        %v662 = vmul.f32 0.5, %v661
        %v663 = vsub.f32 1.5, %v662
        %v664 = vmul.f32 %v659, %v663
        %vm665 = vweird.f32 %v656
        %vm666 = vweird.f32 %v659
        %vm667 = vmor %vm665, %vm666
        %v668 = vsel %vm667, %v659, %v664
        %v669 = vrsqrt.pop %v657
        %v670 = vmul.f32 %v669, %v657
        %v671 = vmul.f32 %v670, %v669
        %v672 = vmul.f32 0.5, %v671
        %v673 = vsub.f32 1.5, %v672
        %v674 = vmul.f32 %v669, %v673
        %vm675 = vweird.f32 %v657
        %vm676 = vweird.f32 %v669
        %vm677 = vmor %vm675, %vm676
        %v678 = vsel %vm677, %v669, %v674
        %v679 = vrsqrt.pop %v658
        %v680 = vmul.f32 %v679, %v658
        %v681 = vmul.f32 %v680, %v679
        %v682 = vmul.f32 0.5, %v681
        %v683 = vsub.f32 1.5, %v682
        %v684 = vmul.f32 %v679, %v683
        %vm685 = vweird.f32 %v658
        %vm686 = vweird.f32 %v679
        %vm687 = vmor %vm685, %vm686
        %v688 = vsel %vm687, %v679, %v684
        %v689 = vmul.f32 %v596, %v668
        %v690 = vmul.f32 %v597, %v678
        %v691 = vmul.f32 %v598, %v688
        %v692 = vld [vmem:[#allocation4] sm:$0x3]
        %v693 = vpack.c.bf16 %v642, %v641
        %v694 = vpack.c.bf16 %v643, %v643
        %695 = vmatpush.bf16.xpose.msra.mxu0 0
        %696 = vmatpush.bf16.xpose.msra.mxu0 0
        %697 = vmatpush.bf16.xpose.msra.mxu0 0
        %698 = vmatpush.bf16.xpose.msra.mxu0 0
        %699 = vmatpush.bf16.xpose.msra.mxu0 0
        %700 = vmatpush.bf16.xpose.msra.mxu0 0
        %701 = vmatpush.bf16.xpose.msra.mxu0 %v694
        %702 = vmatpush.bf16.xpose.msra.mxu0 %v693
        %703 = vmatmul.bf16.gmra.mxu0 %v692
        %v704 = vpop.f32.mrf.mxu0
        %v705 = vadd.f32 0.0, %v704
        %v706 = vpop.f32.mrf.mxu0
        %707 = vdwg.mxu0
        %v708 = vmul.f32 %v705, 0.088388346
        %v709 = vsel %vm342, %v708, -1e+30
        %v710 = vld [vmem:[#allocation5] sm:$0xf]
        %vm711 = vcmask 191488
        %v712 = vsel %vm711, %v709, -inf
        %713 = vmax.xlane.f32.xlu0 %v712
        %v714 = vpop.xlane.xlu0 %713
        %v715 = vmax.f32 %v710, %v714
        %v716 = vsub.f32 %v710, %v715
        %v717 = vmul.f32 %v716, 1.442695
        %v718 = vpow.pop %v717
        %720 = vset.pattern.permute.xlu0 0
        %721 = vperm.xlu0 %720, %v715
        %v722 = vpop.permute.xlu0 %721
        %v724 = vsub.f32 %v709, %v722
        %v725 = vmul.f32 %v724, 1.442695
        %v726 = vpow.pop %v725
        %v727 = vld [vmem:[#allocation6] sm:$0xf]
        %v728 = vmul.f32 %v718, %v727
        %v729 = vsel %vm711, %v726, 0.0
        %730 = vadd.xlane.f32.xlu0 %v729
        %v731 = vpop.xlane.xlu0 %730
        %v732 = vadd.f32 %v728, %v731
        %vm733 = vcmask 3072
        %734 = vst.msk [vmem:[#allocation6] sm:$0xf] %vm733, %v732
        %v735 = vld [vmem:[#allocation7] sm:$0xf]
        %737 = vset.pattern.permute.xlu0 0
        %738 = vperm.xlu0 %737, %v718
        %v739 = vpop.permute.xlu0 %738
        %v741 = vmul.f32 %v739, %v735
        %v742 = vpack.c.bf16 %v726, %v726
        %v743 = vpack.c.bf16 %v690, %v689
        %v744 = vpack.c.bf16 %v691, %v691
        %vm745 = vcmask 195584
        %v747 = vsel %vm745, %v742, 0
        %vm749 = vcmask 1043456
        %v751 = vsel %vm749, %v744, 0
        %753 = vmatpush.bf16.msra.mxu0 0
        %754 = vmatpush.bf16.msra.mxu0 0
        %755 = vmatpush.bf16.msra.mxu0 0
        %756 = vmatpush.bf16.msra.mxu0 0
        %757 = vmatpush.bf16.msra.mxu0 0
        %758 = vmatpush.bf16.msra.mxu0 0
        %759 = vmatpush.bf16.msra.mxu0 %v751
        %760 = vmatpush.bf16.msra.mxu0 %v743
        %761 = vmatmul.bf16.gmra.mxu0 %v747
        %v762 = vpop.f32.mrf.mxu0
        %v763 = vadd.f32 0.0, %v762
        %v764 = vpop.f32.mrf.mxu0
        %765 = vdwg.mxu0
        %v766 = vadd.f32 %v741, %v763
        %vm767 = vcmask 257024
        %768 = vst.msk [vmem:[#allocation7] sm:$0xf] %vm767, %v766
        %769 = vst.msk [vmem:[#allocation5] sm:$0xf] %vm733, %v715
        // Predicated region
        $region73: #{tpu_custom_call.1} parent=67 // pred_check
          %p770 = pneg %p466
        $region74: #{tpu_custom_call.1} parent=67 // pred_check_branch
          %772 = sbr.rel (%p770) target = $region76
        $region75: #{tpu_custom_call.1} parent=67 // pred_region
          %v773 = vld [vmem:[#allocation6] sm:$0xf]
          %v774 = vrcp.pop %v773
          %v775 = vld [vmem:[#allocation7] sm:$0xf]
          %777 = vset.pattern.permute.xlu0 0
          %778 = vperm.xlu0 %777, %v774
          %v779 = vpop.permute.xlu0 %778
          %v781 = vmul.f32 %v775, %v779
          %v782 = vld [vmem:[%s6] sm:$0xff]
          %v783 = vld [vmem:[%s6 + $0x8] sm:$0xff]
          %v784 = vld [vmem:[%s6 + $0x10] sm:$0xff]
          %v785 = vld [vmem:[%s6 + $0x18] sm:$0xff]
          %v786 = vld [vmem:[%s7] sm:$0x1]
          %v788 = vperm.slane %v786, 0
          %v791 = vsel %vm553, %v781, 0
          %793 = vmatpush.msra.mxu0 0.0
          %794 = vmatpush.msra.mxu0 0.0
          %795 = vmatpush.msra.mxu0 0.0
          %796 = vmatpush.msra.mxu0 0.0
          %797 = vmatpush.msra.mxu0 0.0
          %798 = vmatpush.msra.mxu0 0.0
          %799 = vmatpush.msra.mxu0 0.0
          %800 = vmatpush.msra.mxu0 0.0
          %801 = vmatpush.msra.mxu0 0.0
          %802 = vmatpush.msra.mxu0 0.0
          %803 = vmatpush.msra.mxu0 0.0
          %804 = vmatpush.msra.mxu0 0.0
          %805 = vmatpush.msra.mxu0 %v785
          %806 = vmatpush.msra.mxu0 %v784
          %807 = vmatpush.msra.mxu0 %v783
          %808 = vmatpush.msra.mxu0 %v782
          %809 = vmatmul.f32.gmra.mxu0 %v791
          %v810 = vpop.f32.mrf.mxu0
          %v811 = vadd.f32 %v788, %v810
          %812 = vdwg.mxu0
          %v813 = vld [vmem:[%s9] sm:$0x1]
          %v814 = vld [vmem:[%s8] sm:$0xff]
          %v815 = vld [vmem:[%s8 + $0x8] sm:$0xff]
          %v816 = vld [vmem:[%s8 + $0x10] sm:$0xff]
          %v817 = vld [vmem:[%s8 + $0x18] sm:$0xff]
          %v819 = vsel %vm553, %v811, 0
          %821 = vmatpush.msra.mxu0 0.0
          %822 = vmatpush.msra.mxu0 0.0
          %823 = vmatpush.msra.mxu0 0.0
          %824 = vmatpush.msra.mxu0 0.0
          %825 = vmatpush.msra.mxu0 0.0
          %826 = vmatpush.msra.mxu0 0.0
          %827 = vmatpush.msra.mxu0 0.0
          %828 = vmatpush.msra.mxu0 0.0
          %829 = vmatpush.msra.mxu0 0.0
          %830 = vmatpush.msra.mxu0 0.0
          %831 = vmatpush.msra.mxu0 0.0
          %832 = vmatpush.msra.mxu0 0.0
          %833 = vmatpush.msra.mxu0 %v817
          %834 = vmatpush.msra.mxu0 %v816
          %835 = vmatpush.msra.mxu0 %v815
          %836 = vmatpush.msra.mxu0 %v814
          %837 = vmatmul.f32.gmra.mxu0 %v819
          %v838 = vpop.f32.mrf.mxu0
          %v839 = vadd.f32 0.0, %v838
          %840 = vdwg.mxu0
          %v841 = vadd.f32 %v813, %v839
          %s842 = scalar_lea.vmem %s8, 32
          %v843 = vld [vmem:[%s842] sm:$0xff]
          %v844 = vld [vmem:[%s842 + $0x8] sm:$0xff]
          %v845 = vld [vmem:[%s842 + $0x10] sm:$0xff]
          %v846 = vld [vmem:[%s842 + $0x18] sm:$0xff]
          %v847 = vrot.slane %v811, 1
          %v848 = vsel %vm553, %v847, 0
          %850 = vmatpush.msra.mxu0 0.0
          %851 = vmatpush.msra.mxu0 0.0
          %852 = vmatpush.msra.mxu0 0.0
          %853 = vmatpush.msra.mxu0 0.0
          %854 = vmatpush.msra.mxu0 0.0
          %855 = vmatpush.msra.mxu0 0.0
          %856 = vmatpush.msra.mxu0 0.0
          %857 = vmatpush.msra.mxu0 0.0
          %858 = vmatpush.msra.mxu0 0.0
          %859 = vmatpush.msra.mxu0 0.0
          %860 = vmatpush.msra.mxu0 0.0
          %861 = vmatpush.msra.mxu0 0.0
          %862 = vmatpush.msra.mxu0 %v846
          %863 = vmatpush.msra.mxu0 %v845
          %864 = vmatpush.msra.mxu0 %v844
          %865 = vmatpush.msra.mxu0 %v843
          %866 = vmatmul.f32.gmra.mxu0 %v848
          %v867 = vpop.f32.mrf.mxu0
          %v868 = vadd.f32 0.0, %v867
          %869 = vdwg.mxu0
          %v870 = vadd.f32 %v841, %v868
          %s871 = scalar_lea.vmem %s8, 64
          %v872 = vld [vmem:[%s871] sm:$0xff]
          %v873 = vld [vmem:[%s871 + $0x8] sm:$0xff]
          %v874 = vld [vmem:[%s871 + $0x10] sm:$0xff]
          %v875 = vld [vmem:[%s871 + $0x18] sm:$0xff]
          %v876 = vrot.slane %v811, 2
          %v877 = vsel %vm553, %v876, 0
          %879 = vmatpush.msra.mxu0 0.0
          %880 = vmatpush.msra.mxu0 0.0
          %881 = vmatpush.msra.mxu0 0.0
          %882 = vmatpush.msra.mxu0 0.0
          %883 = vmatpush.msra.mxu0 0.0
          %884 = vmatpush.msra.mxu0 0.0
          %885 = vmatpush.msra.mxu0 0.0
          %886 = vmatpush.msra.mxu0 0.0
          %887 = vmatpush.msra.mxu0 0.0
          %888 = vmatpush.msra.mxu0 0.0
          %889 = vmatpush.msra.mxu0 0.0
          %890 = vmatpush.msra.mxu0 0.0
          %891 = vmatpush.msra.mxu0 %v875
          %892 = vmatpush.msra.mxu0 %v874
          %893 = vmatpush.msra.mxu0 %v873
          %894 = vmatpush.msra.mxu0 %v872
          %895 = vmatmul.f32.gmra.mxu0 %v877
          %v896 = vpop.f32.mrf.mxu0
          %v897 = vadd.f32 0.0, %v896
          %898 = vdwg.mxu0
          %v899 = vadd.f32 %v870, %v897
          %s900 = scalar_lea.vmem %s8, 96
          %v901 = vld [vmem:[%s900] sm:$0xff]
          %v902 = vld [vmem:[%s900 + $0x8] sm:$0xff]
          %v903 = vld [vmem:[%s900 + $0x10] sm:$0xff]
          %v904 = vld [vmem:[%s900 + $0x18] sm:$0xff]
          %v905 = vrot.slane %v811, 3
          %v906 = vsel %vm553, %v905, 0
          %908 = vmatpush.msra.mxu0 0.0
          %909 = vmatpush.msra.mxu0 0.0
          %910 = vmatpush.msra.mxu0 0.0
          %911 = vmatpush.msra.mxu0 0.0
          %912 = vmatpush.msra.mxu0 0.0
          %913 = vmatpush.msra.mxu0 0.0
          %914 = vmatpush.msra.mxu0 0.0
          %915 = vmatpush.msra.mxu0 0.0
          %916 = vmatpush.msra.mxu0 0.0
          %917 = vmatpush.msra.mxu0 0.0
          %918 = vmatpush.msra.mxu0 0.0
          %919 = vmatpush.msra.mxu0 0.0
          %920 = vmatpush.msra.mxu0 %v904
          %921 = vmatpush.msra.mxu0 %v903
          %922 = vmatpush.msra.mxu0 %v902
          %923 = vmatpush.msra.mxu0 %v901
          %924 = vmatmul.f32.gmra.mxu0 %v906
          %v925 = vpop.f32.mrf.mxu0
          %v926 = vadd.f32 0.0, %v925
          %927 = vdwg.mxu0
          %v928 = vadd.f32 %v899, %v926
          %v929 = vlaneseq
          %v930 = vshrl.u32 %v929, 7
          %vm931 = vcmp.eq.s32.totalorder %v930, %v337
          %v932 = vsel %vm931, 1, 0
          %v933 = vcvt.s32.f32 %v932
          %v934 = vld [vmem:[#allocation2] sm:$0xf]
          %936 = vset.pattern.permute.xlu0 0
          %937 = vperm.xlu0 %936, %v934
          %v938 = vpop.permute.xlu0 %937
          %v940 = vmul.f32 %v938, %v933
          %vm941 = vcmask 27648
          %v942 = vsel %vm941, %v940, 0.0
          %v943 = vrot.slane %v942, 4
          %v944 = vadd.f32 %v942, %v943
          %v945 = vrot.slane %v944, 2
          %v946 = vadd.f32 %v944, %v945
          %v947 = vrot.slane %v946, 1
          %v948 = vadd.f32 %v946, %v947
          %v949 = vxor.u32 %v948, 2147483648
          %v950 = vmul.f32 %v949, 1.442695
          %v951 = vpow.pop %v950
          %v952 = vadd.f32 %v951, 1.0
          %v953 = vrcp.pop %v952
          %v954 = vmul.f32 %v952, %v953
          %v955 = vsub.f32 1.0, %v954
          %v956 = vmul.f32 %v953, %v955
          %v957 = vadd.f32 %v953, %v956
          %vm958 = vweird.f32 %v952
          %vm959 = vweird.f32 %v953
          %vm960 = vmor %vm958, %vm959
          %v961 = vsel %vm960, %v953, %v957
          %v962 = vand.u32 2147483647, %v952
          %vm963 = vcmp.eq.f32.partialorder %v962, 8.507059e+37
          %v964 = vand.u32 %v952, 2147483648
          %v965 = vor.u32 1.1754944e-38, %v964
          %v966 = vsel %vm963, %v965, %v961
          %v967 = vmul.f32 1.0, %v966
          %v968 = vxor.u32 %v928, 2147483648
          %v969 = vmul.f32 %v968, 1.442695
          %v970 = vpow.pop %v969
          %v971 = vadd.f32 %v970, 1.0
          %v972 = vrcp.pop %v971
          %v973 = vmul.f32 %v971, %v972
          %v974 = vsub.f32 1.0, %v973
          %v975 = vmul.f32 %v972, %v974
          %v976 = vadd.f32 %v972, %v975
          %vm977 = vweird.f32 %v971
          %vm978 = vweird.f32 %v972
          %vm979 = vmor %vm977, %vm978
          %v980 = vsel %vm979, %v972, %v976
          %v981 = vand.u32 2147483647, %v971
          %vm982 = vcmp.eq.f32.partialorder %v981, 8.507059e+37
          %v983 = vand.u32 %v971, 2147483648
          %v984 = vor.u32 1.1754944e-38, %v983
          %v985 = vsel %vm982, %v984, %v980
          %v986 = vmul.f32 1.0, %v985
          %vm987 = vcmp.le.s32.totalorder %v930, %v337
          %v988 = vsel %vm987, 1, 0
          %v989 = vcvt.s32.f32 %v988
          %v990 = vsub.f32 1.0, %v967
          %v991 = vmax.f32 %v990, 1e-30
          %v992 = vlog2.pop %v991
          %v993 = vmul.f32 %v992, 0.6931472
          %vm994 = vcmask 31744
          %v996 = vsel %vm994, %v993, 0
          %v999 = vsel %vm749, %v989, 0
          %1001 = vmatpush.msra.mxu0 0.0
          %1002 = vmatpush.msra.mxu0 0.0
          %1003 = vmatpush.msra.mxu0 0.0
          %1004 = vmatpush.msra.mxu0 0.0
          %1005 = vmatpush.msra.mxu0 0.0
          %1006 = vmatpush.msra.mxu0 0.0
          %1007 = vmatpush.msra.mxu0 0.0
          %1008 = vmatpush.msra.mxu0 0.0
          %1009 = vmatpush.msra.mxu0 0.0
          %1010 = vmatpush.msra.mxu0 0.0
          %1011 = vmatpush.msra.mxu0 0.0
          %1012 = vmatpush.msra.mxu0 0.0
          %1013 = vmatpush.msra.mxu0 0.0
          %1014 = vmatpush.msra.mxu0 0.0
          %1015 = vmatpush.msra.mxu0 0.0
          %1016 = vmatpush.msra.mxu0 %v999
          %1017 = vmatmul.f32.gmra.mxu0 %v996
          %v1018 = vpop.f32.mrf.mxu0
          %v1019 = vadd.f32 0.0, %v1018
          %1020 = vdwg.mxu0
          %v1021 = vmul.f32 %v1019, 1.442695
          %v1022 = vpow.pop %v1021
          %v1023 = vsub.f32 1.0, %v986
          %v1024 = vmax.f32 %v1023, 1e-30
          %v1025 = vlog2.pop %v1024
          %v1026 = vmul.f32 %v1025, 0.6931472
          %v1028 = vsel %vm994, %v1026, 0
          %1030 = vmatpush.msra.mxu0 0.0
          %1031 = vmatpush.msra.mxu0 0.0
          %1032 = vmatpush.msra.mxu0 0.0
          %1033 = vmatpush.msra.mxu0 0.0
          %1034 = vmatpush.msra.mxu0 0.0
          %1035 = vmatpush.msra.mxu0 0.0
          %1036 = vmatpush.msra.mxu0 0.0
          %1037 = vmatpush.msra.mxu0 0.0
          %1038 = vmatpush.msra.mxu0 0.0
          %1039 = vmatpush.msra.mxu0 0.0
          %1040 = vmatpush.msra.mxu0 0.0
          %1041 = vmatpush.msra.mxu0 0.0
          %1042 = vmatpush.msra.mxu0 0.0
          %1043 = vmatpush.msra.mxu0 0.0
          %1044 = vmatpush.msra.mxu0 0.0
          %1045 = vmatpush.msra.mxu0 %v999
          %1046 = vmatmul.f32.gmra.mxu0 %v1028
          %v1047 = vpop.f32.mrf.mxu0
          %v1048 = vadd.f32 0.0, %v1047
          %1049 = vdwg.mxu0
          %v1050 = vmul.f32 %v1048, 1.442695
          %v1051 = vpow.pop %v1050
          %vm1052 = vcmask 24576
          %1053 = vst.msk [vmem:[%s10] sm:$0x1] %vm1052, %v948
          %1054 = vst.msk [vmem:[%s10 + $0x1] sm:$0x1] %vm1052, %v928
          %1055 = vst.msk [vmem:[%s10 + $0x2] sm:$0x1] %vm1052, %v967
          %1056 = vst.msk [vmem:[%s10 + $0x3] sm:$0x1] %vm1052, %v1022
          %1057 = vst.msk [vmem:[%s10 + $0x4] sm:$0x1] %vm1052, %v986
          %1058 = vst.msk [vmem:[%s10 + $0x5] sm:$0x1] %vm1052, %v1051
        $region76: #{tpu_custom_call.1} parent=67 // pred_fallthru
          _
      $region68: #{tpu_custom_call.1} parent=55 // pred_fallthru
        _
      // Predicated region
      $region77: #{tpu_custom_call.1} parent=55 // pred_check
        %p1059 = pneg %p241
      $region78: #{tpu_custom_call.1} parent=55 // pred_check_branch
        %1061 = sbr.rel (%p1059) target = $region80
      $region79: #{tpu_custom_call.1} parent=55 // pred_region
        _
      $region80: #{tpu_custom_call.1} parent=55 // pred_fallthru
        _
      // Predicated region
      $region81: #{tpu_custom_call.1} parent=55 // pred_check
        %p1062 = pneg %p241
      $region82: #{tpu_custom_call.1} parent=55 // pred_check_branch
        %1064 = sbr.rel (%p1062) target = $region84
      $region83: #{tpu_custom_call.1} parent=55 // pred_region
        _
      $region84: #{tpu_custom_call.1} parent=55 // pred_fallthru
        _
    $region56: #{tpu_custom_call.1} parent=5 // pred_fallthru
      _
    %p1065 = scmp.le.s32.totalorder 2, %s17
    // Predicated region
    $region85: #{tpu_custom_call.1} parent=5 // pred_check
      %p1066 = pneg %p1065
    $region86: #{tpu_custom_call.1} parent=5 // pred_check_branch
      %1068 = sbr.rel (%p1066) target = $region88
    $region87: #{tpu_custom_call.1} parent=5 // pred_region
      %s1069 = ssub.s32 %s17, 2
    $region88: #{tpu_custom_call.1} parent=5 // pred_fallthru
      _
  $region6: #{tpu_custom_call.1} parent=0 // loop_footer
    %s21 = sadd.s32 1, %s17
  $region7: #{tpu_custom_call.1} parent=0 // loop_footer_branch
    %16 = sbr.rel target = $region3
  $region8: #{tpu_custom_call.1} parent=0 // loop_exit
    _

</llo_original>
